<compile_context>
chip_gen: v5e
topology: v5e:2x2
jax: 0.10.0
libtpu: 0.0.40
codegen_flags: <defaults>
</compile_context>

<pallas_src>
import math
import functools

import jax
import jax.numpy as jnp
from jax.experimental import pallas as pl
from jax.experimental.pallas import tpu as pltpu


# ----------------------------------------------------------------------------
# Fused kernel: one-hot gather -> LSTM recurrence -> Linear -> LogSoftmax.
# gate_table row v = emb[v] @ W_ih^T + (b_ih + b_hh), gate order [i, f, o, g].
# ----------------------------------------------------------------------------
def lstm_gen_kernel(tok_ref, gtbl_ref, whh_ref, h0_ref, c0_ref,
                    wout_ref, bout_ref,
                    pred_ref, hT_ref, cT_ref,
                    *, seq_len, batch, hidden_dim, vocab_size):
    T, B, H, V = seq_len, batch, hidden_dim, vocab_size

    # ---- fused embedding + input projection: one-hot gather on the MXU -----
    tok = tok_ref[...]                                           # (T*B, 1) i32
    vocab_ids = jax.lax.broadcasted_iota(jnp.int32, (T * B, V), 1)
    onehot = (tok == vocab_ids).astype(jnp.float32)              # (T*B, V)
    xg_all = jnp.dot(onehot, gtbl_ref[...],
                     preferred_element_type=jnp.float32)         # (T*B, 4H)

    whh = whh_ref[...]                                           # (H, 4H)
    wout = wout_ref[...]                                         # (H, V)
    bout = bout_ref[...]                                         # (1, V)

    h = h0_ref[...].astype(jnp.float32)                          # (B, H)
    c = c0_ref[...].astype(jnp.float32)                          # (B, H)

    preds = []
    for t in range(T):                                           # small static T
        gates = xg_all[t * B:(t + 1) * B, :] + jnp.dot(
            h, whh, preferred_element_type=jnp.float32)          # (B, 4H)
        # sigmoid(x) == 0.5*tanh(0.5*x) + 0.5 : single EUP op for [i, f, o]
        sig = 0.5 * jnp.tanh(0.5 * gates[:, :3 * H]) + 0.5
        g_g = jnp.tanh(gates[:, 3 * H:])
        i_g = sig[:, 0 * H:1 * H]
        f_g = sig[:, 1 * H:2 * H]
        o_g = sig[:, 2 * H:3 * H]
        c = f_g * c + i_g * g_g
        h = o_g * jnp.tanh(c)

        # Output projection + log-softmax for this timestep (lanes = vocab).
        logits = jnp.dot(h, wout, preferred_element_type=jnp.float32) + bout
        m = jnp.max(logits, axis=-1, keepdims=True)
        s = logits - m
        lse = jnp.log(jnp.sum(jnp.exp(s), axis=-1, keepdims=True))
        preds.append(s - lse)                                    # (B, V)

    # One unmasked, lane-dense store; row-major (B, T*V) == (B*T, V) ordering.
    pred_ref[...] = jnp.concatenate(preds, axis=1).astype(pred_ref.dtype)
    hT_ref[...] = h.astype(hT_ref.dtype)
    cT_ref[...] = c.astype(cT_ref.dtype)


def lstm_generator_forward(tok_tm, gate_table, w_hh_t, h0, c0, w_out_t, b_out):
    """tok_tm: (T*B, 1) int32 tokens, time-major flattening (row = t*B + b).
       Returns: pred (B, T*V) f32 log-probs, hT (B, H), cT (B, H)."""
    TB = tok_tm.shape[0]
    V, G = gate_table.shape
    H = w_hh_t.shape[0]
    B = h0.shape[0]
    T = TB // B

    kernel = functools.partial(lstm_gen_kernel, seq_len=T, batch=B,
                               hidden_dim=H, vocab_size=V)
    return pl.pallas_call(
        kernel,
        out_shape=(
            jax.ShapeDtypeStruct((B, T * V), jnp.float32),
            jax.ShapeDtypeStruct((B, H), jnp.float32),
            jax.ShapeDtypeStruct((B, H), jnp.float32),
        ),
        grid=(1,),
        in_specs=[
            pl.BlockSpec((TB, 1), lambda i: (0, 0)),      # tokens (time-major)
            pl.BlockSpec((V, G), lambda i: (0, 0)),       # gate table (VMEM-resident)
            pl.BlockSpec((H, G), lambda i: (0, 0)),       # W_hh^T
            pl.BlockSpec((B, H), lambda i: (0, 0)),       # h0
            pl.BlockSpec((B, H), lambda i: (0, 0)),       # c0
            pl.BlockSpec((H, V), lambda i: (0, 0)),       # W_out^T
            pl.BlockSpec((1, V), lambda i: (0, 0)),       # b_out
        ],
        out_specs=(
            pl.BlockSpec((B, T * V), lambda i: (0, 0)),   # log-probs slab
            pl.BlockSpec((B, H), lambda i: (0, 0)),       # hT
            pl.BlockSpec((B, H), lambda i: (0, 0)),       # cT
        ),
        compiler_params=pltpu.CompilerParams(
            dimension_semantics=("arbitrary",)),
    )(tok_tm, gate_table, w_hh_t, h0, c0, w_out_t, b_out)


# ----------------------------------------------------------------------------
# LSTMGenerator (forward only).
# ----------------------------------------------------------------------------
def _reorder_gates(p):
    """PyTorch LSTM gate order [i, f, g, o] -> kernel order [i, f, o, g]."""
    i, f, g, o = jnp.split(p, 4, axis=0)
    return jnp.concatenate([i, f, o, g], axis=0)


class LSTMGeneratorPallas:
    def __init__(self, embedding_dim, hidden_dim, vocab_size, max_seq_len,
                 padding_idx, key):
        self.embedding_dim = embedding_dim
        self.hidden_dim = hidden_dim
        self.vocab_size = vocab_size
        self.max_seq_len = max_seq_len
        self.padding_idx = padding_idx

        k = jax.random.split(key, 7)
        # mimic gen_init == 'normal': std = 1/sqrt(param.shape[0])
        def init(kk, shape):
            return (jax.random.normal(kk, shape, jnp.float32)
                    / math.sqrt(shape[0]))

        H, E, V = hidden_dim, embedding_dim, vocab_size

        emb = init(k[0], (V, E))
        emb = emb.at[padding_idx].set(0.0)          # nn.Embedding padding_idx row
        self.embeddings = emb

        # PyTorch-layout LSTM params (kept for the reference check).
        self._w_ih = init(k[1], (4 * H, E))
        self._w_hh = init(k[2], (4 * H, H))
        self._b_ih = init(k[3], (4 * H,))
        self._b_hh = init(k[4], (4 * H,))
        # lstm2out: Linear(hidden_dim, vocab_size): weight (V, H), bias (V,)
        self._w_out = init(k[5], (V, H))
        self._b_out = init(k[6], (V,))

        # --- kernel-side fused / reordered layouts ---------------------------
        w_ih_r = _reorder_gates(self._w_ih)         # (4H, E), order [i,f,o,g]
        w_hh_r = _reorder_gates(self._w_hh)         # (4H, H)
        b_r = _reorder_gates(self._b_ih) + _reorder_gates(self._b_hh)   # (4H,)

        # Input projection hoisted all the way out: emb(token)@W_ih^T + b is a
        # linear map of a one-hot gather, so precompute it per vocab row.
        self.gate_table = emb @ w_ih_r.T + b_r[None, :]     # (V, 4H)
        self.w_hh_t = w_hh_r.T                              # (H, 4H)

        self.w_out_t = self._w_out.T                        # (H, V)
        self.b_out = self._b_out.reshape(1, V)

    def init_hidden(self, batch_size):
        h = jnp.zeros((1, batch_size, self.hidden_dim), jnp.float32)
        c = jnp.zeros((1, batch_size, self.hidden_dim), jnp.float32)
        return (h, c)

    def forward(self, inp, hidden, need_hidden=False):
        """inp: (B, T) int token ids (or (B,) for seq_len=1); hidden: (h, c)."""
        h0, c0 = hidden
        if inp.ndim == 1:
            inp = inp[:, None]                      # seq_len = 1 (sample() path)
        B, T = inp.shape
        H, V = self.hidden_dim, self.vocab_size

        # Time-major flat token ids: row = t*B + b (tiny int transpose).
        tok_tm = inp.astype(jnp.int32).T.reshape(T * B, 1)

        pred_slab, hT, cT = lstm_generator_forward(
            tok_tm, self.gate_table, self.w_hh_t,
            h0.reshape(B, H), c0.reshape(B, H),
            self.w_out_t, self.b_out)

        # (B, T*V) -> (B*T, V): free row-major reshape; row = b*T + t, matching
        # PyTorch's out.contiguous().view(-1, hidden_dim) ordering.
        pred = pred_slab.reshape(B * T, V)

        if need_hidden:
            return pred, (hT.reshape(1, B, H), cT.reshape(1, B, H))
        return pred


# ----------------------------------------------------------------------------
# Pure-JAX reference (PyTorch-layout params, original [i,f,g,o] gate order).
# ----------------------------------------------------------------------------
def reference_forward(gen, inp, hidden):
    h0, c0 = hidden
    B, T = inp.shape
    H = gen.hidden_dim
    emb = jnp.take(gen.embeddings, inp, axis=0)      # (B, T, E)
    w_ih_t = gen._w_ih.T
    w_hh_t = gen._w_hh.T
    b = (gen._b_ih + gen._b_hh)[None, :]

    def step(carry, x_t):
        h, c = carry
        gates = x_t @ w_ih_t + h @ w_hh_t + b
        i = jax.nn.sigmoid(gates[:, 0 * H:1 * H])
        f = jax.nn.sigmoid(gates[:, 1 * H:2 * H])
        g = jnp.tanh(gates[:, 2 * H:3 * H])
        o = jax.nn.sigmoid(gates[:, 3 * H:4 * H])
        c_new = f * c + i * g
        h_new = o * jnp.tanh(c_new)
        return (h_new, c_new), h_new

    (hT, cT), outs = jax.lax.scan(step,
                                  (h0.reshape(B, H), c0.reshape(B, H)),
                                  jnp.transpose(emb, (1, 0, 2)))
    out = jnp.transpose(outs, (1, 0, 2)).reshape(B * T, H)
    logits = out @ gen._w_out.T + gen._b_out[None, :]
    return jax.nn.log_softmax(logits, axis=-1), hT, cT


if __name__ == "__main__":
    key = jax.random.PRNGKey(0)
    k_param, k_inp, k_h, k_c = jax.random.split(key, 4)

    embedding_dim = 32
    hidden_dim = 32
    vocab_size = 128
    max_seq_len = 8
    padding_idx = 0
    batch = 8
    seq = max_seq_len

    gen = LSTMGeneratorPallas(embedding_dim, hidden_dim, vocab_size,
                              max_seq_len, padding_idx, k_param)

    inp = jax.random.randint(k_inp, (batch, seq), 0, vocab_size, jnp.int32)
    h0 = 0.1 * jax.random.normal(k_h, (1, batch, hidden_dim), jnp.float32)
    c0 = 0.1 * jax.random.normal(k_c, (1, batch, hidden_dim), jnp.float32)

    pred, (hT, cT) = gen.forward(inp, (h0, c0), need_hidden=True)
    jax.block_until_ready((pred, hT, cT))

    ref_pred, ref_hT, ref_cT = reference_forward(gen, inp, (h0, c0))
    assert pred.shape == (batch * seq, vocab_size)
    assert jnp.max(jnp.abs(pred - ref_pred)) < 1e-4, "pred mismatch vs reference"
    assert jnp.max(jnp.abs(hT[0] - ref_hT)) < 1e-4, "hT mismatch vs reference"
    assert jnp.max(jnp.abs(cT[0] - ref_cT)) < 1e-4, "cT mismatch vs reference"

    # 1-D input path (seq_len == 1, as used by sample()).
    pred1 = gen.forward(inp[:, 0], (h0, c0))
    jax.block_until_ready(pred1)
    assert pred1.shape == (batch, vocab_size)

    print("KERNEL_OK")
</pallas_src>

<mosaic_0001>
module attributes {stable_mosaic.version = 11 : i64} {
  func.func @lstm_gen_kernel(%arg0: i32, %arg1: memref<64x1xi32, #tpu.memory_space<vmem>>, %arg2: memref<128x128xf32, #tpu.memory_space<vmem>>, %arg3: memref<32x128xf32, #tpu.memory_space<vmem>>, %arg4: memref<8x32xf32, #tpu.memory_space<vmem>>, %arg5: memref<8x32xf32, #tpu.memory_space<vmem>>, %arg6: memref<32x128xf32, #tpu.memory_space<vmem>>, %arg7: memref<1x128xf32, #tpu.memory_space<vmem>>, %arg8: memref<8x1024xf32, #tpu.memory_space<vmem>>, %arg9: memref<8x32xf32, #tpu.memory_space<vmem>>, %arg10: memref<8x32xf32, #tpu.memory_space<vmem>>) attributes {dimension_semantics = [#tpu.dimension_semantics<arbitrary>], iteration_bounds = array<i64: 1>, scalar_prefetch = 0 : i64, scratch_operands = 0 : i64, tpu.core_type = #tpu.core_type<tc>, window_params = [{pipeline_mode = #tpu.pipeline_mode<synchronous>, transform_indices = @transform_0, window_bounds = array<i64: 64, 1>}, {pipeline_mode = #tpu.pipeline_mode<synchronous>, transform_indices = @transform_1, window_bounds = array<i64: 128, 128>}, {pipeline_mode = #tpu.pipeline_mode<synchronous>, transform_indices = @transform_2, window_bounds = array<i64: 32, 128>}, {pipeline_mode = #tpu.pipeline_mode<synchronous>, transform_indices = @transform_3, window_bounds = array<i64: 8, 32>}, {pipeline_mode = #tpu.pipeline_mode<synchronous>, transform_indices = @transform_4, window_bounds = array<i64: 8, 32>}, {pipeline_mode = #tpu.pipeline_mode<synchronous>, transform_indices = @transform_5, window_bounds = array<i64: 32, 128>}, {pipeline_mode = #tpu.pipeline_mode<synchronous>, transform_indices = @transform_6, window_bounds = array<i64: 1, 128>}, {pipeline_mode = #tpu.pipeline_mode<synchronous>, transform_indices = @transform_7, window_bounds = array<i64: 8, 1024>}, {pipeline_mode = #tpu.pipeline_mode<synchronous>, transform_indices = @transform_8, window_bounds = array<i64: 8, 32>}, {pipeline_mode = #tpu.pipeline_mode<synchronous>, transform_indices = @transform_9, window_bounds = array<i64: 8, 32>}]} {
    %c0 = arith.constant 0 : index
    %c0_0 = arith.constant 0 : index
    %0 = vector.load %arg1[%c0, %c0_0] : memref<64x1xi32, #tpu.memory_space<vmem>>, vector<64x1xi32>
    %1 = tpu.iota {dimensions = array<i32: 1>} : vector<64x128xi32>
    %2 = vector.broadcast %0 : vector<64x1xi32> to vector<64x128xi32>
    %3 = arith.cmpi eq, %2, %1 : vector<64x128xi32>
    %4 = arith.extui %3 : vector<64x128xi1> to vector<64x128xi32>
    %5 = arith.sitofp %4 : vector<64x128xi32> to vector<64x128xf32>
    %c0_1 = arith.constant 0 : index
    %c0_2 = arith.constant 0 : index
    %6 = vector.load %arg2[%c0_1, %c0_2] : memref<128x128xf32, #tpu.memory_space<vmem>>, vector<128x128xf32>
    %cst = arith.constant dense<0.000000e+00> : vector<64x128xf32>
    %7 = tpu.matmul %5, %6, %cst {dimension_numbers = #tpu.dot_dimension_numbers<[1], [0], [0], [1], [0, 0, 1, 1], [], []>} : vector<64x128xf32>, vector<128x128xf32>, vector<64x128xf32> -> vector<64x128xf32>
    %c0_3 = arith.constant 0 : index
    %c0_4 = arith.constant 0 : index
    %8 = vector.load %arg3[%c0_3, %c0_4] : memref<32x128xf32, #tpu.memory_space<vmem>>, vector<32x128xf32>
    %c0_5 = arith.constant 0 : index
    %c0_6 = arith.constant 0 : index
    %9 = vector.load %arg6[%c0_5, %c0_6] : memref<32x128xf32, #tpu.memory_space<vmem>>, vector<32x128xf32>
    %c0_7 = arith.constant 0 : index
    %c0_8 = arith.constant 0 : index
    %10 = vector.load %arg7[%c0_7, %c0_8] : memref<1x128xf32, #tpu.memory_space<vmem>>, vector<1x128xf32>
    %c0_9 = arith.constant 0 : index
    %c0_10 = arith.constant 0 : index
    %11 = vector.load %arg4[%c0_9, %c0_10] : memref<8x32xf32, #tpu.memory_space<vmem>>, vector<8x32xf32>
    %c0_11 = arith.constant 0 : index
    %c0_12 = arith.constant 0 : index
    %12 = vector.load %arg5[%c0_11, %c0_12] : memref<8x32xf32, #tpu.memory_space<vmem>>, vector<8x32xf32>
    %13 = vector.extract_strided_slice %7 {offsets = [0, 0], sizes = [8, 128], strides = [1, 1]} : vector<64x128xf32> to vector<8x128xf32>
    %cst_13 = arith.constant dense<0.000000e+00> : vector<8x128xf32>
    %14 = tpu.matmul %11, %8, %cst_13 {dimension_numbers = #tpu.dot_dimension_numbers<[1], [0], [0], [1], [0, 0, 1, 1], [], []>} : vector<8x32xf32>, vector<32x128xf32>, vector<8x128xf32> -> vector<8x128xf32>
    %15 = arith.addf %13, %14 : vector<8x128xf32>
    %16 = vector.extract_strided_slice %15 {offsets = [0, 0], sizes = [8, 96], strides = [1, 1]} : vector<8x128xf32> to vector<8x96xf32>
    %cst_14 = arith.constant 5.000000e-01 : f32
    %17 = vector.broadcast %cst_14 : f32 to vector<8x96xf32>
    %18 = arith.mulf %17, %16 : vector<8x96xf32>
    %19 = math.tanh %18 : vector<8x96xf32>
    %cst_15 = arith.constant 5.000000e-01 : f32
    %20 = vector.broadcast %cst_15 : f32 to vector<8x96xf32>
    %21 = arith.mulf %20, %19 : vector<8x96xf32>
    %cst_16 = arith.constant 5.000000e-01 : f32
    %22 = vector.broadcast %cst_16 : f32 to vector<8x96xf32>
    %23 = arith.addf %21, %22 : vector<8x96xf32>
    %24 = vector.extract_strided_slice %15 {offsets = [0, 96], sizes = [8, 32], strides = [1, 1]} : vector<8x128xf32> to vector<8x32xf32>
    %25 = math.tanh %24 : vector<8x32xf32>
    %26 = vector.extract_strided_slice %23 {offsets = [0, 0], sizes = [8, 32], strides = [1, 1]} : vector<8x96xf32> to vector<8x32xf32>
    %27 = vector.extract_strided_slice %23 {offsets = [0, 32], sizes = [8, 32], strides = [1, 1]} : vector<8x96xf32> to vector<8x32xf32>
    %28 = vector.extract_strided_slice %23 {offsets = [0, 64], sizes = [8, 32], strides = [1, 1]} : vector<8x96xf32> to vector<8x32xf32>
    %29 = arith.mulf %27, %12 : vector<8x32xf32>
    %30 = arith.mulf %26, %25 : vector<8x32xf32>
    %31 = arith.addf %29, %30 : vector<8x32xf32>
    %32 = math.tanh %31 : vector<8x32xf32>
    %33 = arith.mulf %28, %32 : vector<8x32xf32>
    %cst_17 = arith.constant dense<0.000000e+00> : vector<8x128xf32>
    %34 = tpu.matmul %33, %9, %cst_17 {dimension_numbers = #tpu.dot_dimension_numbers<[1], [0], [0], [1], [0, 0, 1, 1], [], []>} : vector<8x32xf32>, vector<32x128xf32>, vector<8x128xf32> -> vector<8x128xf32>
    %35 = vector.broadcast %10 : vector<1x128xf32> to vector<8x128xf32>
    %36 = arith.addf %34, %35 : vector<8x128xf32>
    %cst_18 = arith.constant dense<0xFF800000> : vector<8xf32>
    %37 = vector.multi_reduction <maximumf>, %36, %cst_18 [1] : vector<8x128xf32> to vector<8xf32>
    %38 = vector.shape_cast %37 : vector<8xf32> to vector<8x1xf32>
    %39 = vector.broadcast %38 : vector<8x1xf32> to vector<8x128xf32>
    %40 = arith.subf %36, %39 : vector<8x128xf32>
    %41 = math.exp %40 : vector<8x128xf32>
    %cst_19 = arith.constant dense<0.000000e+00> : vector<8xf32>
    %42 = vector.multi_reduction <add>, %41, %cst_19 [1] : vector<8x128xf32> to vector<8xf32>
    %43 = vector.shape_cast %42 : vector<8xf32> to vector<8x1xf32>
    %44 = math.log %43 : vector<8x1xf32>
    %45 = vector.broadcast %44 : vector<8x1xf32> to vector<8x128xf32>
    %46 = arith.subf %40, %45 : vector<8x128xf32>
    %47 = vector.extract_strided_slice %7 {offsets = [8, 0], sizes = [8, 128], strides = [1, 1]} : vector<64x128xf32> to vector<8x128xf32>
    %cst_20 = arith.constant dense<0.000000e+00> : vector<8x128xf32>
    %48 = tpu.matmul %33, %8, %cst_20 {dimension_numbers = #tpu.dot_dimension_numbers<[1], [0], [0], [1], [0, 0, 1, 1], [], []>} : vector<8x32xf32>, vector<32x128xf32>, vector<8x128xf32> -> vector<8x128xf32>
    %49 = arith.addf %47, %48 : vector<8x128xf32>
    %50 = vector.extract_strided_slice %49 {offsets = [0, 0], sizes = [8, 96], strides = [1, 1]} : vector<8x128xf32> to vector<8x96xf32>
    %cst_21 = arith.constant 5.000000e-01 : f32
    %51 = vector.broadcast %cst_21 : f32 to vector<8x96xf32>
    %52 = arith.mulf %51, %50 : vector<8x96xf32>
    %53 = math.tanh %52 : vector<8x96xf32>
    %cst_22 = arith.constant 5.000000e-01 : f32
    %54 = vector.broadcast %cst_22 : f32 to vector<8x96xf32>
    %55 = arith.mulf %54, %53 : vector<8x96xf32>
    %cst_23 = arith.constant 5.000000e-01 : f32
    %56 = vector.broadcast %cst_23 : f32 to vector<8x96xf32>
    %57 = arith.addf %55, %56 : vector<8x96xf32>
    %58 = vector.extract_strided_slice %49 {offsets = [0, 96], sizes = [8, 32], strides = [1, 1]} : vector<8x128xf32> to vector<8x32xf32>
    %59 = math.tanh %58 : vector<8x32xf32>
    %60 = vector.extract_strided_slice %57 {offsets = [0, 0], sizes = [8, 32], strides = [1, 1]} : vector<8x96xf32> to vector<8x32xf32>
    %61 = vector.extract_strided_slice %57 {offsets = [0, 32], sizes = [8, 32], strides = [1, 1]} : vector<8x96xf32> to vector<8x32xf32>
    %62 = vector.extract_strided_slice %57 {offsets = [0, 64], sizes = [8, 32], strides = [1, 1]} : vector<8x96xf32> to vector<8x32xf32>
    %63 = arith.mulf %61, %31 : vector<8x32xf32>
    %64 = arith.mulf %60, %59 : vector<8x32xf32>
    %65 = arith.addf %63, %64 : vector<8x32xf32>
    %66 = math.tanh %65 : vector<8x32xf32>
    %67 = arith.mulf %62, %66 : vector<8x32xf32>
    %cst_24 = arith.constant dense<0.000000e+00> : vector<8x128xf32>
    %68 = tpu.matmul %67, %9, %cst_24 {dimension_numbers = #tpu.dot_dimension_numbers<[1], [0], [0], [1], [0, 0, 1, 1], [], []>} : vector<8x32xf32>, vector<32x128xf32>, vector<8x128xf32> -> vector<8x128xf32>
    %69 = vector.broadcast %10 : vector<1x128xf32> to vector<8x128xf32>
    %70 = arith.addf %68, %69 : vector<8x128xf32>
    %cst_25 = arith.constant dense<0xFF800000> : vector<8xf32>
    %71 = vector.multi_reduction <maximumf>, %70, %cst_25 [1] : vector<8x128xf32> to vector<8xf32>
    %72 = vector.shape_cast %71 : vector<8xf32> to vector<8x1xf32>
    %73 = vector.broadcast %72 : vector<8x1xf32> to vector<8x128xf32>
    %74 = arith.subf %70, %73 : vector<8x128xf32>
    %75 = math.exp %74 : vector<8x128xf32>
    %cst_26 = arith.constant dense<0.000000e+00> : vector<8xf32>
    %76 = vector.multi_reduction <add>, %75, %cst_26 [1] : vector<8x128xf32> to vector<8xf32>
    %77 = vector.shape_cast %76 : vector<8xf32> to vector<8x1xf32>
    %78 = math.log %77 : vector<8x1xf32>
    %79 = vector.broadcast %78 : vector<8x1xf32> to vector<8x128xf32>
    %80 = arith.subf %74, %79 : vector<8x128xf32>
    %81 = vector.extract_strided_slice %7 {offsets = [16, 0], sizes = [8, 128], strides = [1, 1]} : vector<64x128xf32> to vector<8x128xf32>
    %cst_27 = arith.constant dense<0.000000e+00> : vector<8x128xf32>
    %82 = tpu.matmul %67, %8, %cst_27 {dimension_numbers = #tpu.dot_dimension_numbers<[1], [0], [0], [1], [0, 0, 1, 1], [], []>} : vector<8x32xf32>, vector<32x128xf32>, vector<8x128xf32> -> vector<8x128xf32>
    %83 = arith.addf %81, %82 : vector<8x128xf32>
    %84 = vector.extract_strided_slice %83 {offsets = [0, 0], sizes = [8, 96], strides = [1, 1]} : vector<8x128xf32> to vector<8x96xf32>
    %cst_28 = arith.constant 5.000000e-01 : f32
    %85 = vector.broadcast %cst_28 : f32 to vector<8x96xf32>
    %86 = arith.mulf %85, %84 : vector<8x96xf32>
    %87 = math.tanh %86 : vector<8x96xf32>
    %cst_29 = arith.constant 5.000000e-01 : f32
    %88 = vector.broadcast %cst_29 : f32 to vector<8x96xf32>
    %89 = arith.mulf %88, %87 : vector<8x96xf32>
    %cst_30 = arith.constant 5.000000e-01 : f32
    %90 = vector.broadcast %cst_30 : f32 to vector<8x96xf32>
    %91 = arith.addf %89, %90 : vector<8x96xf32>
    %92 = vector.extract_strided_slice %83 {offsets = [0, 96], sizes = [8, 32], strides = [1, 1]} : vector<8x128xf32> to vector<8x32xf32>
    %93 = math.tanh %92 : vector<8x32xf32>
    %94 = vector.extract_strided_slice %91 {offsets = [0, 0], sizes = [8, 32], strides = [1, 1]} : vector<8x96xf32> to vector<8x32xf32>
    %95 = vector.extract_strided_slice %91 {offsets = [0, 32], sizes = [8, 32], strides = [1, 1]} : vector<8x96xf32> to vector<8x32xf32>
    %96 = vector.extract_strided_slice %91 {offsets = [0, 64], sizes = [8, 32], strides = [1, 1]} : vector<8x96xf32> to vector<8x32xf32>
    %97 = arith.mulf %95, %65 : vector<8x32xf32>
    %98 = arith.mulf %94, %93 : vector<8x32xf32>
    %99 = arith.addf %97, %98 : vector<8x32xf32>
    %100 = math.tanh %99 : vector<8x32xf32>
    %101 = arith.mulf %96, %100 : vector<8x32xf32>
    %cst_31 = arith.constant dense<0.000000e+00> : vector<8x128xf32>
    %102 = tpu.matmul %101, %9, %cst_31 {dimension_numbers = #tpu.dot_dimension_numbers<[1], [0], [0], [1], [0, 0, 1, 1], [], []>} : vector<8x32xf32>, vector<32x128xf32>, vector<8x128xf32> -> vector<8x128xf32>
    %103 = vector.broadcast %10 : vector<1x128xf32> to vector<8x128xf32>
    %104 = arith.addf %102, %103 : vector<8x128xf32>
    %cst_32 = arith.constant dense<0xFF800000> : vector<8xf32>
    %105 = vector.multi_reduction <maximumf>, %104, %cst_32 [1] : vector<8x128xf32> to vector<8xf32>
    %106 = vector.shape_cast %105 : vector<8xf32> to vector<8x1xf32>
    %107 = vector.broadcast %106 : vector<8x1xf32> to vector<8x128xf32>
    %108 = arith.subf %104, %107 : vector<8x128xf32>
    %109 = math.exp %108 : vector<8x128xf32>
    %cst_33 = arith.constant dense<0.000000e+00> : vector<8xf32>
    %110 = vector.multi_reduction <add>, %109, %cst_33 [1] : vector<8x128xf32> to vector<8xf32>
    %111 = vector.shape_cast %110 : vector<8xf32> to vector<8x1xf32>
    %112 = math.log %111 : vector<8x1xf32>
    %113 = vector.broadcast %112 : vector<8x1xf32> to vector<8x128xf32>
    %114 = arith.subf %108, %113 : vector<8x128xf32>
    %115 = vector.extract_strided_slice %7 {offsets = [24, 0], sizes = [8, 128], strides = [1, 1]} : vector<64x128xf32> to vector<8x128xf32>
    %cst_34 = arith.constant dense<0.000000e+00> : vector<8x128xf32>
    %116 = tpu.matmul %101, %8, %cst_34 {dimension_numbers = #tpu.dot_dimension_numbers<[1], [0], [0], [1], [0, 0, 1, 1], [], []>} : vector<8x32xf32>, vector<32x128xf32>, vector<8x128xf32> -> vector<8x128xf32>
    %117 = arith.addf %115, %116 : vector<8x128xf32>
    %118 = vector.extract_strided_slice %117 {offsets = [0, 0], sizes = [8, 96], strides = [1, 1]} : vector<8x128xf32> to vector<8x96xf32>
    %cst_35 = arith.constant 5.000000e-01 : f32
    %119 = vector.broadcast %cst_35 : f32 to vector<8x96xf32>
    %120 = arith.mulf %119, %118 : vector<8x96xf32>
    %121 = math.tanh %120 : vector<8x96xf32>
    %cst_36 = arith.constant 5.000000e-01 : f32
    %122 = vector.broadcast %cst_36 : f32 to vector<8x96xf32>
    %123 = arith.mulf %122, %121 : vector<8x96xf32>
    %cst_37 = arith.constant 5.000000e-01 : f32
    %124 = vector.broadcast %cst_37 : f32 to vector<8x96xf32>
    %125 = arith.addf %123, %124 : vector<8x96xf32>
    %126 = vector.extract_strided_slice %117 {offsets = [0, 96], sizes = [8, 32], strides = [1, 1]} : vector<8x128xf32> to vector<8x32xf32>
    %127 = math.tanh %126 : vector<8x32xf32>
    %128 = vector.extract_strided_slice %125 {offsets = [0, 0], sizes = [8, 32], strides = [1, 1]} : vector<8x96xf32> to vector<8x32xf32>
    %129 = vector.extract_strided_slice %125 {offsets = [0, 32], sizes = [8, 32], strides = [1, 1]} : vector<8x96xf32> to vector<8x32xf32>
    %130 = vector.extract_strided_slice %125 {offsets = [0, 64], sizes = [8, 32], strides = [1, 1]} : vector<8x96xf32> to vector<8x32xf32>
    %131 = arith.mulf %129, %99 : vector<8x32xf32>
    %132 = arith.mulf %128, %127 : vector<8x32xf32>
    %133 = arith.addf %131, %132 : vector<8x32xf32>
    %134 = math.tanh %133 : vector<8x32xf32>
    %135 = arith.mulf %130, %134 : vector<8x32xf32>
    %cst_38 = arith.constant dense<0.000000e+00> : vector<8x128xf32>
    %136 = tpu.matmul %135, %9, %cst_38 {dimension_numbers = #tpu.dot_dimension_numbers<[1], [0], [0], [1], [0, 0, 1, 1], [], []>} : vector<8x32xf32>, vector<32x128xf32>, vector<8x128xf32> -> vector<8x128xf32>
    %137 = vector.broadcast %10 : vector<1x128xf32> to vector<8x128xf32>
    %138 = arith.addf %136, %137 : vector<8x128xf32>
    %cst_39 = arith.constant dense<0xFF800000> : vector<8xf32>
    %139 = vector.multi_reduction <maximumf>, %138, %cst_39 [1] : vector<8x128xf32> to vector<8xf32>
    %140 = vector.shape_cast %139 : vector<8xf32> to vector<8x1xf32>
    %141 = vector.broadcast %140 : vector<8x1xf32> to vector<8x128xf32>
    %142 = arith.subf %138, %141 : vector<8x128xf32>
    %143 = math.exp %142 : vector<8x128xf32>
    %cst_40 = arith.constant dense<0.000000e+00> : vector<8xf32>
    %144 = vector.multi_reduction <add>, %143, %cst_40 [1] : vector<8x128xf32> to vector<8xf32>
    %145 = vector.shape_cast %144 : vector<8xf32> to vector<8x1xf32>
    %146 = math.log %145 : vector<8x1xf32>
    %147 = vector.broadcast %146 : vector<8x1xf32> to vector<8x128xf32>
    %148 = arith.subf %142, %147 : vector<8x128xf32>
    %149 = vector.extract_strided_slice %7 {offsets = [32, 0], sizes = [8, 128], strides = [1, 1]} : vector<64x128xf32> to vector<8x128xf32>
    %cst_41 = arith.constant dense<0.000000e+00> : vector<8x128xf32>
    %150 = tpu.matmul %135, %8, %cst_41 {dimension_numbers = #tpu.dot_dimension_numbers<[1], [0], [0], [1], [0, 0, 1, 1], [], []>} : vector<8x32xf32>, vector<32x128xf32>, vector<8x128xf32> -> vector<8x128xf32>
    %151 = arith.addf %149, %150 : vector<8x128xf32>
    %152 = vector.extract_strided_slice %151 {offsets = [0, 0], sizes = [8, 96], strides = [1, 1]} : vector<8x128xf32> to vector<8x96xf32>
    %cst_42 = arith.constant 5.000000e-01 : f32
    %153 = vector.broadcast %cst_42 : f32 to vector<8x96xf32>
    %154 = arith.mulf %153, %152 : vector<8x96xf32>
    %155 = math.tanh %154 : vector<8x96xf32>
    %cst_43 = arith.constant 5.000000e-01 : f32
    %156 = vector.broadcast %cst_43 : f32 to vector<8x96xf32>
    %157 = arith.mulf %156, %155 : vector<8x96xf32>
    %cst_44 = arith.constant 5.000000e-01 : f32
    %158 = vector.broadcast %cst_44 : f32 to vector<8x96xf32>
    %159 = arith.addf %157, %158 : vector<8x96xf32>
    %160 = vector.extract_strided_slice %151 {offsets = [0, 96], sizes = [8, 32], strides = [1, 1]} : vector<8x128xf32> to vector<8x32xf32>
    %161 = math.tanh %160 : vector<8x32xf32>
    %162 = vector.extract_strided_slice %159 {offsets = [0, 0], sizes = [8, 32], strides = [1, 1]} : vector<8x96xf32> to vector<8x32xf32>
    %163 = vector.extract_strided_slice %159 {offsets = [0, 32], sizes = [8, 32], strides = [1, 1]} : vector<8x96xf32> to vector<8x32xf32>
    %164 = vector.extract_strided_slice %159 {offsets = [0, 64], sizes = [8, 32], strides = [1, 1]} : vector<8x96xf32> to vector<8x32xf32>
    %165 = arith.mulf %163, %133 : vector<8x32xf32>
    %166 = arith.mulf %162, %161 : vector<8x32xf32>
    %167 = arith.addf %165, %166 : vector<8x32xf32>
    %168 = math.tanh %167 : vector<8x32xf32>
    %169 = arith.mulf %164, %168 : vector<8x32xf32>
    %cst_45 = arith.constant dense<0.000000e+00> : vector<8x128xf32>
    %170 = tpu.matmul %169, %9, %cst_45 {dimension_numbers = #tpu.dot_dimension_numbers<[1], [0], [0], [1], [0, 0, 1, 1], [], []>} : vector<8x32xf32>, vector<32x128xf32>, vector<8x128xf32> -> vector<8x128xf32>
    %171 = vector.broadcast %10 : vector<1x128xf32> to vector<8x128xf32>
    %172 = arith.addf %170, %171 : vector<8x128xf32>
    %cst_46 = arith.constant dense<0xFF800000> : vector<8xf32>
    %173 = vector.multi_reduction <maximumf>, %172, %cst_46 [1] : vector<8x128xf32> to vector<8xf32>
    %174 = vector.shape_cast %173 : vector<8xf32> to vector<8x1xf32>
    %175 = vector.broadcast %174 : vector<8x1xf32> to vector<8x128xf32>
    %176 = arith.subf %172, %175 : vector<8x128xf32>
    %177 = math.exp %176 : vector<8x128xf32>
    %cst_47 = arith.constant dense<0.000000e+00> : vector<8xf32>
    %178 = vector.multi_reduction <add>, %177, %cst_47 [1] : vector<8x128xf32> to vector<8xf32>
    %179 = vector.shape_cast %178 : vector<8xf32> to vector<8x1xf32>
    %180 = math.log %179 : vector<8x1xf32>
    %181 = vector.broadcast %180 : vector<8x1xf32> to vector<8x128xf32>
    %182 = arith.subf %176, %181 : vector<8x128xf32>
    %183 = vector.extract_strided_slice %7 {offsets = [40, 0], sizes = [8, 128], strides = [1, 1]} : vector<64x128xf32> to vector<8x128xf32>
    %cst_48 = arith.constant dense<0.000000e+00> : vector<8x128xf32>
    %184 = tpu.matmul %169, %8, %cst_48 {dimension_numbers = #tpu.dot_dimension_numbers<[1], [0], [0], [1], [0, 0, 1, 1], [], []>} : vector<8x32xf32>, vector<32x128xf32>, vector<8x128xf32> -> vector<8x128xf32>
    %185 = arith.addf %183, %184 : vector<8x128xf32>
    %186 = vector.extract_strided_slice %185 {offsets = [0, 0], sizes = [8, 96], strides = [1, 1]} : vector<8x128xf32> to vector<8x96xf32>
    %cst_49 = arith.constant 5.000000e-01 : f32
    %187 = vector.broadcast %cst_49 : f32 to vector<8x96xf32>
    %188 = arith.mulf %187, %186 : vector<8x96xf32>
    %189 = math.tanh %188 : vector<8x96xf32>
    %cst_50 = arith.constant 5.000000e-01 : f32
    %190 = vector.broadcast %cst_50 : f32 to vector<8x96xf32>
    %191 = arith.mulf %190, %189 : vector<8x96xf32>
    %cst_51 = arith.constant 5.000000e-01 : f32
    %192 = vector.broadcast %cst_51 : f32 to vector<8x96xf32>
    %193 = arith.addf %191, %192 : vector<8x96xf32>
    %194 = vector.extract_strided_slice %185 {offsets = [0, 96], sizes = [8, 32], strides = [1, 1]} : vector<8x128xf32> to vector<8x32xf32>
    %195 = math.tanh %194 : vector<8x32xf32>
    %196 = vector.extract_strided_slice %193 {offsets = [0, 0], sizes = [8, 32], strides = [1, 1]} : vector<8x96xf32> to vector<8x32xf32>
    %197 = vector.extract_strided_slice %193 {offsets = [0, 32], sizes = [8, 32], strides = [1, 1]} : vector<8x96xf32> to vector<8x32xf32>
    %198 = vector.extract_strided_slice %193 {offsets = [0, 64], sizes = [8, 32], strides = [1, 1]} : vector<8x96xf32> to vector<8x32xf32>
    %199 = arith.mulf %197, %167 : vector<8x32xf32>
    %200 = arith.mulf %196, %195 : vector<8x32xf32>
    %201 = arith.addf %199, %200 : vector<8x32xf32>
    %202 = math.tanh %201 : vector<8x32xf32>
    %203 = arith.mulf %198, %202 : vector<8x32xf32>
    %cst_52 = arith.constant dense<0.000000e+00> : vector<8x128xf32>
    %204 = tpu.matmul %203, %9, %cst_52 {dimension_numbers = #tpu.dot_dimension_numbers<[1], [0], [0], [1], [0, 0, 1, 1], [], []>} : vector<8x32xf32>, vector<32x128xf32>, vector<8x128xf32> -> vector<8x128xf32>
    %205 = vector.broadcast %10 : vector<1x128xf32> to vector<8x128xf32>
    %206 = arith.addf %204, %205 : vector<8x128xf32>
    %cst_53 = arith.constant dense<0xFF800000> : vector<8xf32>
    %207 = vector.multi_reduction <maximumf>, %206, %cst_53 [1] : vector<8x128xf32> to vector<8xf32>
    %208 = vector.shape_cast %207 : vector<8xf32> to vector<8x1xf32>
    %209 = vector.broadcast %208 : vector<8x1xf32> to vector<8x128xf32>
    %210 = arith.subf %206, %209 : vector<8x128xf32>
    %211 = math.exp %210 : vector<8x128xf32>
    %cst_54 = arith.constant dense<0.000000e+00> : vector<8xf32>
    %212 = vector.multi_reduction <add>, %211, %cst_54 [1] : vector<8x128xf32> to vector<8xf32>
    %213 = vector.shape_cast %212 : vector<8xf32> to vector<8x1xf32>
    %214 = math.log %213 : vector<8x1xf32>
    %215 = vector.broadcast %214 : vector<8x1xf32> to vector<8x128xf32>
    %216 = arith.subf %210, %215 : vector<8x128xf32>
    %217 = vector.extract_strided_slice %7 {offsets = [48, 0], sizes = [8, 128], strides = [1, 1]} : vector<64x128xf32> to vector<8x128xf32>
    %cst_55 = arith.constant dense<0.000000e+00> : vector<8x128xf32>
    %218 = tpu.matmul %203, %8, %cst_55 {dimension_numbers = #tpu.dot_dimension_numbers<[1], [0], [0], [1], [0, 0, 1, 1], [], []>} : vector<8x32xf32>, vector<32x128xf32>, vector<8x128xf32> -> vector<8x128xf32>
    %219 = arith.addf %217, %218 : vector<8x128xf32>
    %220 = vector.extract_strided_slice %219 {offsets = [0, 0], sizes = [8, 96], strides = [1, 1]} : vector<8x128xf32> to vector<8x96xf32>
    %cst_56 = arith.constant 5.000000e-01 : f32
    %221 = vector.broadcast %cst_56 : f32 to vector<8x96xf32>
    %222 = arith.mulf %221, %220 : vector<8x96xf32>
    %223 = math.tanh %222 : vector<8x96xf32>
    %cst_57 = arith.constant 5.000000e-01 : f32
    %224 = vector.broadcast %cst_57 : f32 to vector<8x96xf32>
    %225 = arith.mulf %224, %223 : vector<8x96xf32>
    %cst_58 = arith.constant 5.000000e-01 : f32
    %226 = vector.broadcast %cst_58 : f32 to vector<8x96xf32>
    %227 = arith.addf %225, %226 : vector<8x96xf32>
    %228 = vector.extract_strided_slice %219 {offsets = [0, 96], sizes = [8, 32], strides = [1, 1]} : vector<8x128xf32> to vector<8x32xf32>
    %229 = math.tanh %228 : vector<8x32xf32>
    %230 = vector.extract_strided_slice %227 {offsets = [0, 0], sizes = [8, 32], strides = [1, 1]} : vector<8x96xf32> to vector<8x32xf32>
    %231 = vector.extract_strided_slice %227 {offsets = [0, 32], sizes = [8, 32], strides = [1, 1]} : vector<8x96xf32> to vector<8x32xf32>
    %232 = vector.extract_strided_slice %227 {offsets = [0, 64], sizes = [8, 32], strides = [1, 1]} : vector<8x96xf32> to vector<8x32xf32>
    %233 = arith.mulf %231, %201 : vector<8x32xf32>
    %234 = arith.mulf %230, %229 : vector<8x32xf32>
    %235 = arith.addf %233, %234 : vector<8x32xf32>
    %236 = math.tanh %235 : vector<8x32xf32>
    %237 = arith.mulf %232, %236 : vector<8x32xf32>
    %cst_59 = arith.constant dense<0.000000e+00> : vector<8x128xf32>
    %238 = tpu.matmul %237, %9, %cst_59 {dimension_numbers = #tpu.dot_dimension_numbers<[1], [0], [0], [1], [0, 0, 1, 1], [], []>} : vector<8x32xf32>, vector<32x128xf32>, vector<8x128xf32> -> vector<8x128xf32>
    %239 = vector.broadcast %10 : vector<1x128xf32> to vector<8x128xf32>
    %240 = arith.addf %238, %239 : vector<8x128xf32>
    %cst_60 = arith.constant dense<0xFF800000> : vector<8xf32>
    %241 = vector.multi_reduction <maximumf>, %240, %cst_60 [1] : vector<8x128xf32> to vector<8xf32>
    %242 = vector.shape_cast %241 : vector<8xf32> to vector<8x1xf32>
    %243 = vector.broadcast %242 : vector<8x1xf32> to vector<8x128xf32>
    %244 = arith.subf %240, %243 : vector<8x128xf32>
    %245 = math.exp %244 : vector<8x128xf32>
    %cst_61 = arith.constant dense<0.000000e+00> : vector<8xf32>
    %246 = vector.multi_reduction <add>, %245, %cst_61 [1] : vector<8x128xf32> to vector<8xf32>
    %247 = vector.shape_cast %246 : vector<8xf32> to vector<8x1xf32>
    %248 = math.log %247 : vector<8x1xf32>
    %249 = vector.broadcast %248 : vector<8x1xf32> to vector<8x128xf32>
    %250 = arith.subf %244, %249 : vector<8x128xf32>
    %251 = vector.extract_strided_slice %7 {offsets = [56, 0], sizes = [8, 128], strides = [1, 1]} : vector<64x128xf32> to vector<8x128xf32>
    %cst_62 = arith.constant dense<0.000000e+00> : vector<8x128xf32>
    %252 = tpu.matmul %237, %8, %cst_62 {dimension_numbers = #tpu.dot_dimension_numbers<[1], [0], [0], [1], [0, 0, 1, 1], [], []>} : vector<8x32xf32>, vector<32x128xf32>, vector<8x128xf32> -> vector<8x128xf32>
    %253 = arith.addf %251, %252 : vector<8x128xf32>
    %254 = vector.extract_strided_slice %253 {offsets = [0, 0], sizes = [8, 96], strides = [1, 1]} : vector<8x128xf32> to vector<8x96xf32>
    %cst_63 = arith.constant 5.000000e-01 : f32
    %255 = vector.broadcast %cst_63 : f32 to vector<8x96xf32>
    %256 = arith.mulf %255, %254 : vector<8x96xf32>
    %257 = math.tanh %256 : vector<8x96xf32>
    %cst_64 = arith.constant 5.000000e-01 : f32
    %258 = vector.broadcast %cst_64 : f32 to vector<8x96xf32>
    %259 = arith.mulf %258, %257 : vector<8x96xf32>
    %cst_65 = arith.constant 5.000000e-01 : f32
    %260 = vector.broadcast %cst_65 : f32 to vector<8x96xf32>
    %261 = arith.addf %259, %260 : vector<8x96xf32>
    %262 = vector.extract_strided_slice %253 {offsets = [0, 96], sizes = [8, 32], strides = [1, 1]} : vector<8x128xf32> to vector<8x32xf32>
    %263 = math.tanh %262 : vector<8x32xf32>
    %264 = vector.extract_strided_slice %261 {offsets = [0, 0], sizes = [8, 32], strides = [1, 1]} : vector<8x96xf32> to vector<8x32xf32>
    %265 = vector.extract_strided_slice %261 {offsets = [0, 32], sizes = [8, 32], strides = [1, 1]} : vector<8x96xf32> to vector<8x32xf32>
    %266 = vector.extract_strided_slice %261 {offsets = [0, 64], sizes = [8, 32], strides = [1, 1]} : vector<8x96xf32> to vector<8x32xf32>
    %267 = arith.mulf %265, %235 : vector<8x32xf32>
    %268 = arith.mulf %264, %263 : vector<8x32xf32>
    %269 = arith.addf %267, %268 : vector<8x32xf32>
    %270 = math.tanh %269 : vector<8x32xf32>
    %271 = arith.mulf %266, %270 : vector<8x32xf32>
    %cst_66 = arith.constant dense<0.000000e+00> : vector<8x128xf32>
    %272 = tpu.matmul %271, %9, %cst_66 {dimension_numbers = #tpu.dot_dimension_numbers<[1], [0], [0], [1], [0, 0, 1, 1], [], []>} : vector<8x32xf32>, vector<32x128xf32>, vector<8x128xf32> -> vector<8x128xf32>
    %273 = vector.broadcast %10 : vector<1x128xf32> to vector<8x128xf32>
    %274 = arith.addf %272, %273 : vector<8x128xf32>
    %cst_67 = arith.constant dense<0xFF800000> : vector<8xf32>
    %275 = vector.multi_reduction <maximumf>, %274, %cst_67 [1] : vector<8x128xf32> to vector<8xf32>
    %276 = vector.shape_cast %275 : vector<8xf32> to vector<8x1xf32>
    %277 = vector.broadcast %276 : vector<8x1xf32> to vector<8x128xf32>
    %278 = arith.subf %274, %277 : vector<8x128xf32>
    %279 = math.exp %278 : vector<8x128xf32>
    %cst_68 = arith.constant dense<0.000000e+00> : vector<8xf32>
    %280 = vector.multi_reduction <add>, %279, %cst_68 [1] : vector<8x128xf32> to vector<8xf32>
    %281 = vector.shape_cast %280 : vector<8xf32> to vector<8x1xf32>
    %282 = math.log %281 : vector<8x1xf32>
    %283 = vector.broadcast %282 : vector<8x1xf32> to vector<8x128xf32>
    %284 = arith.subf %278, %283 : vector<8x128xf32>
    %285 = tpu.concatenate %46, %80, %114, %148, %182, %216, %250, %284 in 1 : vector<8x128xf32>, vector<8x128xf32>, vector<8x128xf32>, vector<8x128xf32>, vector<8x128xf32>, vector<8x128xf32>, vector<8x128xf32>, vector<8x128xf32> -> vector<8x1024xf32>
    %c0_69 = arith.constant 0 : index
    %c0_70 = arith.constant 0 : index
    %286 = vector.load %arg8[%c0_69, %c0_70] : memref<8x1024xf32, #tpu.memory_space<vmem>>, vector<8x1024xf32>
    tpu.vector_store %arg8[%c0_69, %c0_70], %285 {strides = array<i32>} : memref<8x1024xf32, #tpu.memory_space<vmem>>, vector<8x1024xf32>,
    %c0_71 = arith.constant 0 : index
    %c0_72 = arith.constant 0 : index
    %287 = vector.load %arg9[%c0_71, %c0_72] : memref<8x32xf32, #tpu.memory_space<vmem>>, vector<8x32xf32>
    tpu.vector_store %arg9[%c0_71, %c0_72], %271 {strides = array<i32>} : memref<8x32xf32, #tpu.memory_space<vmem>>, vector<8x32xf32>,
    %c0_73 = arith.constant 0 : index
    %c0_74 = arith.constant 0 : index
    %288 = vector.load %arg10[%c0_73, %c0_74] : memref<8x32xf32, #tpu.memory_space<vmem>>, vector<8x32xf32>
    tpu.vector_store %arg10[%c0_73, %c0_74], %269 {strides = array<i32>} : memref<8x32xf32, #tpu.memory_space<vmem>>, vector<8x32xf32>,
    return
  }
  func.func @transform_0(%arg0: i32) -> (i32, i32) {
    %c0_i32 = arith.constant 0 : i32
    %c0_i32_0 = arith.constant 0 : i32
    %c0_i32_1 = arith.constant 0 : i32
    return %c0_i32, %c0_i32_0 : i32, i32
  }
  func.func @transform_1(%arg0: i32) -> (i32, i32) {
    %c0_i32 = arith.constant 0 : i32
    %c0_i32_0 = arith.constant 0 : i32
    %c0_i32_1 = arith.constant 0 : i32
    return %c0_i32, %c0_i32_0 : i32, i32
  }
  func.func @transform_2(%arg0: i32) -> (i32, i32) {
    %c0_i32 = arith.constant 0 : i32
    %c0_i32_0 = arith.constant 0 : i32
    %c0_i32_1 = arith.constant 0 : i32
    return %c0_i32, %c0_i32_0 : i32, i32
  }
  func.func @transform_3(%arg0: i32) -> (i32, i32) {
    %c0_i32 = arith.constant 0 : i32
    %c0_i32_0 = arith.constant 0 : i32
    %c0_i32_1 = arith.constant 0 : i32
    return %c0_i32, %c0_i32_0 : i32, i32
  }
  func.func @transform_4(%arg0: i32) -> (i32, i32) {
    %c0_i32 = arith.constant 0 : i32
    %c0_i32_0 = arith.constant 0 : i32
    %c0_i32_1 = arith.constant 0 : i32
    return %c0_i32, %c0_i32_0 : i32, i32
  }
  func.func @transform_5(%arg0: i32) -> (i32, i32) {
    %c0_i32 = arith.constant 0 : i32
    %c0_i32_0 = arith.constant 0 : i32
    %c0_i32_1 = arith.constant 0 : i32
    return %c0_i32, %c0_i32_0 : i32, i32
  }
  func.func @transform_6(%arg0: i32) -> (i32, i32) {
    %c0_i32 = arith.constant 0 : i32
    %c0_i32_0 = arith.constant 0 : i32
    %c0_i32_1 = arith.constant 0 : i32
    return %c0_i32, %c0_i32_0 : i32, i32
  }
  func.func @transform_7(%arg0: i32) -> (i32, i32) {
    %c0_i32 = arith.constant 0 : i32
    %c0_i32_0 = arith.constant 0 : i32
    %c0_i32_1 = arith.constant 0 : i32
    return %c0_i32, %c0_i32_0 : i32, i32
  }
  func.func @transform_8(%arg0: i32) -> (i32, i32) {
    %c0_i32 = arith.constant 0 : i32
    %c0_i32_0 = arith.constant 0 : i32
    %c0_i32_1 = arith.constant 0 : i32
    return %c0_i32, %c0_i32_0 : i32, i32
  }
  func.func @transform_9(%arg0: i32) -> (i32, i32) {
    %c0_i32 = arith.constant 0 : i32
    %c0_i32_0 = arith.constant 0 : i32
    %c0_i32_1 = arith.constant 0 : i32
    return %c0_i32, %c0_i32_0 : i32, i32
  }
}

</mosaic_0001>

<llo_original>
// kernel: tpu_custom_call.1
$region0: #{tpu_custom_call.1}
  #allocation0 [shape = 'u32[]', space=smem, size = 0x4, offset = 0x4, fixed_abs, tag = 'smem constant byte address 0x4 - core index']
  #allocation1 [shape = 'u32[72,128]{1,0:T(1,128)}', space=vmem, size = 0x9000, scoped, tag = 'internal scratch']
  %s0 = inlined_call_operand.vmem [shape: s32[64,1], index: 0, kind: input, shape index: {}]
  %s1 = inlined_call_operand.hbm [shape: f32[128,128], index: 1, kind: input, shape index: {}]
  %s2 = inlined_call_operand.vmem [shape: f32[32,128], index: 2, kind: input, shape index: {}]
  %s3 = inlined_call_operand.hbm [shape: f32[8,32], index: 3, kind: input, shape index: {}]
  %s4 = inlined_call_operand.hbm [shape: f32[8,32], index: 4, kind: input, shape index: {}]
  %s5 = inlined_call_operand.vmem [shape: f32[32,128], index: 5, kind: input, shape index: {}]
  %s6 = inlined_call_operand.vmem [shape: f32[1,128], index: 6, kind: input, shape index: {}]
  %s7 = inlined_call_operand.hbm [shape: f32[8,1024], index: 7, kind: output, shape index: {0}]
  %s8 = inlined_call_operand.hbm [shape: f32[8,32], index: 8, kind: output, shape index: {1}]
  %s9 = inlined_call_operand.hbm [shape: f32[8,32], index: 9, kind: output, shape index: {2}]
  %10 = xla_tuple %s7, %s8, %s9
  %s11 = sld [smem:[#allocation0]]
  $region66: #{tpu_custom_call.1} parent=0
    _
  %s13 = ssub.s32 1, %s11
  %s14 = scalar_select 0, %s13, %s11
  $region1: #{tpu_custom_call.1} parent=0
    #allocation2 [shape = 'u8[65536]{0}', space=vmem, size = 0x10000, scoped, tag = 'input window, operand 1, single buffered']
    #allocation3 [shape = 's32[1]{0}', space=sflag, size = 0x4, scoped, tag = 'scoped memory for tpu_custom_call.1']
    #allocation4 [shape = 's32[1]{0}', space=sflag, size = 0x4, scoped, tag = 'scoped memory for tpu_custom_call.1']
    #allocation5 [shape = 'u8[4096]{0}', space=vmem, size = 0x1000, scoped, tag = 'input window, operand 3, single buffered']
    #allocation6 [shape = 's32[1]{0}', space=sflag, size = 0x4, scoped, tag = 'scoped memory for tpu_custom_call.1']
    #allocation7 [shape = 'u8[4096]{0}', space=vmem, size = 0x1000, scoped, tag = 'input window, operand 4, single buffered']
    #allocation8 [shape = 'u8[32768]{0}', space=vmem, size = 0x8000, scoped, tag = 'output window, operand 0, single buffered']
    #allocation9 [shape = 'u8[4096]{0}', space=vmem, size = 0x1000, scoped, tag = 'output window, operand 1, single buffered']
    #allocation10 [shape = 's32[1]{0}', space=sflag, size = 0x4, scoped, tag = 'scoped memory for tpu_custom_call.1']
    #allocation11 [shape = 'u8[4096]{0}', space=vmem, size = 0x1000, scoped, tag = 'output window, operand 2, single buffered']
    %15 = vsyncpa [#allocation3], 0
    %16 = vsyncpa [#allocation6], 0
    %17 = vsyncpa [#allocation4], 0
    %18 = vsyncpa [#allocation10], 0
    // Predicated region
    $region2: #{tpu_custom_call.1} parent=1 // pred_check
      _
    $region3: #{tpu_custom_call.1} parent=1 // pred_check_branch
      %20 = sbr.rel (0) target = $region5
    $region4: #{tpu_custom_call.1} parent=1 // pred_region
      _
    $region5: #{tpu_custom_call.1} parent=1 // pred_fallthru
      _
    // Predicated region
    $region6: #{tpu_custom_call.1} parent=1 // pred_check
      _
    $region7: #{tpu_custom_call.1} parent=1 // pred_check_branch
      %22 = sbr.rel (0) target = $region9
    $region8: #{tpu_custom_call.1} parent=1 // pred_region
      %24 = vsyncadd [#allocation3], 0
      %s25 = sshll.u32 %s1, 4
      %s26 = int_to_ptr.hbm [resolvable:$true] %s25
      %s27 = sshll.u32 [#allocation2], 4
      %s28 = int_to_ptr.vmem [resolvable:$true] %s27
      %33 = dma.hbm_to_vmem [thread:$0]  %s26, 2048, %s28, [#allocation3], 128, 128, 8
    $region9: #{tpu_custom_call.1} parent=1 // pred_fallthru
      _
    // Predicated region
    $region10: #{tpu_custom_call.1} parent=1 // pred_check
      _
    $region11: #{tpu_custom_call.1} parent=1 // pred_check_branch
      %35 = sbr.rel (0) target = $region13
    $region12: #{tpu_custom_call.1} parent=1 // pred_region
      _
    $region13: #{tpu_custom_call.1} parent=1 // pred_fallthru
      _
    // Predicated region
    $region14: #{tpu_custom_call.1} parent=1 // pred_check
      _
    $region15: #{tpu_custom_call.1} parent=1 // pred_check_branch
      %37 = sbr.rel (0) target = $region17
    $region16: #{tpu_custom_call.1} parent=1 // pred_region
      %39 = vsyncadd [#allocation6], 0
      %s41 = sshll.u32 %s3, 4
      %s42 = int_to_ptr.hbm [resolvable:$true] %s41
      %s43 = sshll.u32 [#allocation5], 4
      %s44 = int_to_ptr.vmem [resolvable:$true] %s43
      %46 = dma.hbm_to_vmem [thread:$0]  %s42, 128, %s44, [#allocation6]
    $region17: #{tpu_custom_call.1} parent=1 // pred_fallthru
      _
    // Predicated region
    $region18: #{tpu_custom_call.1} parent=1 // pred_check
      _
    $region19: #{tpu_custom_call.1} parent=1 // pred_check_branch
      %48 = sbr.rel (0) target = $region21
    $region20: #{tpu_custom_call.1} parent=1 // pred_region
      %50 = vsyncadd [#allocation6], 0
      %s52 = sshll.u32 %s4, 4
      %s53 = int_to_ptr.hbm [resolvable:$true] %s52
      %s54 = sshll.u32 [#allocation7], 4
      %s55 = int_to_ptr.vmem [resolvable:$true] %s54
      %57 = dma.hbm_to_vmem [thread:$0]  %s53, 128, %s55, [#allocation6]
    $region21: #{tpu_custom_call.1} parent=1 // pred_fallthru
      _
    // Predicated region
    $region22: #{tpu_custom_call.1} parent=1 // pred_check
      _
    $region23: #{tpu_custom_call.1} parent=1 // pred_check_branch
      %59 = sbr.rel (0) target = $region25
    $region24: #{tpu_custom_call.1} parent=1 // pred_region
      _
    $region25: #{tpu_custom_call.1} parent=1 // pred_fallthru
      _
    // Predicated region
    $region26: #{tpu_custom_call.1} parent=1 // pred_check
      _
    $region27: #{tpu_custom_call.1} parent=1 // pred_check_branch
      %61 = sbr.rel (0) target = $region29
    $region28: #{tpu_custom_call.1} parent=1 // pred_region
      _
    $region29: #{tpu_custom_call.1} parent=1 // pred_fallthru
      _
    // Predicated region
    $region30: #{tpu_custom_call.1} parent=1 // pred_check
      _
    $region31: #{tpu_custom_call.1} parent=1 // pred_check_branch
      %63 = sbr.rel (0) target = $region33
    $region32: #{tpu_custom_call.1} parent=1 // pred_region
      %65 = dma.done [#allocation3], 2048
    $region33: #{tpu_custom_call.1} parent=1 // pred_fallthru
      _
    // Predicated region
    $region34: #{tpu_custom_call.1} parent=1 // pred_check
      _
    $region35: #{tpu_custom_call.1} parent=1 // pred_check_branch
      %67 = sbr.rel (0) target = $region37
    $region36: #{tpu_custom_call.1} parent=1 // pred_region
      %69 = dma.done [#allocation6], 128
    $region37: #{tpu_custom_call.1} parent=1 // pred_fallthru
      _
    // Predicated region
    $region38: #{tpu_custom_call.1} parent=1 // pred_check
      _
    $region39: #{tpu_custom_call.1} parent=1 // pred_check_branch
      %71 = sbr.rel (0) target = $region41
    $region40: #{tpu_custom_call.1} parent=1 // pred_region
      %73 = dma.done [#allocation6], 128
    $region41: #{tpu_custom_call.1} parent=1 // pred_fallthru
      _
    %v74 = vld [vmem:[%s0] sm:$0xff]
    %v75 = vld [vmem:[%s0 + $0x8] sm:$0xff]
    %v76 = vld [vmem:[%s0 + $0x10] sm:$0xff]
    %v77 = vld [vmem:[%s0 + $0x18] sm:$0xff]
    %v78 = vld [vmem:[%s0 + $0x20] sm:$0xff]
    %v79 = vld [vmem:[%s0 + $0x28] sm:$0xff]
    %v80 = vld [vmem:[%s0 + $0x30] sm:$0xff]
    %v81 = vld [vmem:[%s0 + $0x38] sm:$0xff]
    %v82 = vlaneseq
    %v83 = vand.u32 %v82, 127
    %84 = vset.pattern.permute.xlu0 0
    %85 = vperm.xlu0 %84, %v74
    %v86 = vpop.permute.xlu0 %85
    %87 = vset.pattern.permute.xlu0 0
    %88 = vperm.xlu0 %87, %v75
    %v89 = vpop.permute.xlu0 %88
    %90 = vset.pattern.permute.xlu0 0
    %91 = vperm.xlu0 %90, %v76
    %v92 = vpop.permute.xlu0 %91
    %93 = vset.pattern.permute.xlu0 0
    %94 = vperm.xlu0 %93, %v77
    %v95 = vpop.permute.xlu0 %94
    %96 = vset.pattern.permute.xlu0 0
    %97 = vperm.xlu0 %96, %v78
    %v98 = vpop.permute.xlu0 %97
    %99 = vset.pattern.permute.xlu0 0
    %100 = vperm.xlu0 %99, %v79
    %v101 = vpop.permute.xlu0 %100
    %102 = vset.pattern.permute.xlu0 0
    %103 = vperm.xlu0 %102, %v80
    %v104 = vpop.permute.xlu0 %103
    %105 = vset.pattern.permute.xlu0 0
    %106 = vperm.xlu0 %105, %v81
    %v107 = vpop.permute.xlu0 %106
    %vm108 = vcmp.eq.s32.totalorder %v86, %v83
    %vm109 = vcmp.eq.s32.totalorder %v89, %v83
    %vm110 = vcmp.eq.s32.totalorder %v92, %v83
    %vm111 = vcmp.eq.s32.totalorder %v95, %v83
    %vm112 = vcmp.eq.s32.totalorder %v98, %v83
    %vm113 = vcmp.eq.s32.totalorder %v101, %v83
    %vm114 = vcmp.eq.s32.totalorder %v104, %v83
    %vm115 = vcmp.eq.s32.totalorder %v107, %v83
    %v116 = vsel %vm108, 1, 0
    %v117 = vsel %vm109, 1, 0
    %v118 = vsel %vm110, 1, 0
    %v119 = vsel %vm111, 1, 0
    %v120 = vsel %vm112, 1, 0
    %v121 = vsel %vm113, 1, 0
    %v122 = vsel %vm114, 1, 0
    %v123 = vsel %vm115, 1, 0
    %v124 = vcvt.s32.f32 %v116
    %v125 = vcvt.s32.f32 %v117
    %v126 = vcvt.s32.f32 %v118
    %v127 = vcvt.s32.f32 %v119
    %v128 = vcvt.s32.f32 %v120
    %v129 = vcvt.s32.f32 %v121
    %v130 = vcvt.s32.f32 %v122
    %v131 = vcvt.s32.f32 %v123
    %v132 = vld [vmem:[#allocation2] sm:$0xff]
    %v133 = vld [vmem:[#allocation2 + $0x8] sm:$0xff]
    %v134 = vld [vmem:[#allocation2 + $0x10] sm:$0xff]
    %v135 = vld [vmem:[#allocation2 + $0x18] sm:$0xff]
    %v136 = vld [vmem:[#allocation2 + $0x20] sm:$0xff]
    %v137 = vld [vmem:[#allocation2 + $0x28] sm:$0xff]
    %v138 = vld [vmem:[#allocation2 + $0x30] sm:$0xff]
    %v139 = vld [vmem:[#allocation2 + $0x38] sm:$0xff]
    %v140 = vld [vmem:[#allocation2 + $0x40] sm:$0xff]
    %v141 = vld [vmem:[#allocation2 + $0x48] sm:$0xff]
    %v142 = vld [vmem:[#allocation2 + $0x50] sm:$0xff]
    %v143 = vld [vmem:[#allocation2 + $0x58] sm:$0xff]
    %v144 = vld [vmem:[#allocation2 + $0x60] sm:$0xff]
    %v145 = vld [vmem:[#allocation2 + $0x68] sm:$0xff]
    %v146 = vld [vmem:[#allocation2 + $0x70] sm:$0xff]
    %v147 = vld [vmem:[#allocation2 + $0x78] sm:$0xff]
    %148 = vmatpush.msra.mxu0 %v147
    %149 = vmatpush.msra.mxu0 %v146
    %150 = vmatpush.msra.mxu0 %v145
    %151 = vmatpush.msra.mxu0 %v144
    %152 = vmatpush.msra.mxu0 %v143
    %153 = vmatpush.msra.mxu0 %v142
    %154 = vmatpush.msra.mxu0 %v141
    %155 = vmatpush.msra.mxu0 %v140
    %156 = vmatpush.msra.mxu0 %v139
    %157 = vmatpush.msra.mxu0 %v138
    %158 = vmatpush.msra.mxu0 %v137
    %159 = vmatpush.msra.mxu0 %v136
    %160 = vmatpush.msra.mxu0 %v135
    %161 = vmatpush.msra.mxu0 %v134
    %162 = vmatpush.msra.mxu0 %v133
    %163 = vmatpush.msra.mxu0 %v132
    %164 = vmatmul.f32.gmra.mxu0 %v124
    %v165 = vpop.f32.mrf.mxu0
    %v166 = vadd.f32 0.0, %v165
    %167 = vmatmul.f32.gmra.mxu0 %v125
    %v168 = vpop.f32.mrf.mxu0
    %v169 = vadd.f32 0.0, %v168
    %170 = vmatmul.f32.gmra.mxu0 %v126
    %v171 = vpop.f32.mrf.mxu0
    %v172 = vadd.f32 0.0, %v171
    %173 = vmatmul.f32.gmra.mxu0 %v127
    %v174 = vpop.f32.mrf.mxu0
    %v175 = vadd.f32 0.0, %v174
    %176 = vmatmul.f32.gmra.mxu0 %v128
    %v177 = vpop.f32.mrf.mxu0
    %v178 = vadd.f32 0.0, %v177
    %179 = vmatmul.f32.gmra.mxu0 %v129
    %v180 = vpop.f32.mrf.mxu0
    %v181 = vadd.f32 0.0, %v180
    %182 = vmatmul.f32.gmra.mxu0 %v130
    %v183 = vpop.f32.mrf.mxu0
    %v184 = vadd.f32 0.0, %v183
    %185 = vmatmul.f32.gmra.mxu0 %v131
    %v186 = vpop.f32.mrf.mxu0
    %v187 = vadd.f32 0.0, %v186
    %188 = vdwg.mxu0
    %v189 = vld [vmem:[%s2] sm:$0xff]
    %v190 = vld [vmem:[%s2 + $0x8] sm:$0xff]
    %v191 = vld [vmem:[%s2 + $0x10] sm:$0xff]
    %v192 = vld [vmem:[%s2 + $0x18] sm:$0xff]
    %v193 = vld [vmem:[%s5] sm:$0xff]
    %v194 = vld [vmem:[%s5 + $0x8] sm:$0xff]
    %v195 = vld [vmem:[%s5 + $0x10] sm:$0xff]
    %v196 = vld [vmem:[%s5 + $0x18] sm:$0xff]
    %v197 = vld [vmem:[%s6] sm:$0x1]
    %v198 = vld [vmem:[#allocation5] sm:$0xff]
    %v199 = vld [vmem:[#allocation7] sm:$0xff]
    %vm200 = vcmask 261120
    %v202 = vsel %vm200, %v198, 0
    %204 = vmatpush.msra.mxu0 0.0
    %205 = vmatpush.msra.mxu0 0.0
    %206 = vmatpush.msra.mxu0 0.0
    %207 = vmatpush.msra.mxu0 0.0
    %208 = vmatpush.msra.mxu0 0.0
    %209 = vmatpush.msra.mxu0 0.0
    %210 = vmatpush.msra.mxu0 0.0
    %211 = vmatpush.msra.mxu0 0.0
    %212 = vmatpush.msra.mxu0 0.0
    %213 = vmatpush.msra.mxu0 0.0
    %214 = vmatpush.msra.mxu0 0.0
    %215 = vmatpush.msra.mxu0 0.0
    %216 = vmatpush.msra.mxu0 %v192
    %217 = vmatpush.msra.mxu0 %v191
    %218 = vmatpush.msra.mxu0 %v190
    %219 = vmatpush.msra.mxu0 %v189
    %220 = vmatmul.f32.gmra.mxu0 %v202
    %v221 = vpop.f32.mrf.mxu0
    %v222 = vadd.f32 0.0, %v221
    %223 = vdwg.mxu0
    %v224 = vadd.f32 %v166, %v222
    %v225 = vmul.f32 %v224, 0.5
    %v226 = vtanh.pop %v225
    %v227 = vmul.f32 %v226, 0.5
    %v228 = vadd.f32 %v227, 0.5
    %v229 = vtanh.pop %v224
    %231 = vrot.lane.b32.xlu0 %v199, 32
    %v232 = vpop.permute.xlu0 %231
    %v234 = vmul.f32 %v228, %v232
    %236 = vrot.lane.b32.xlu0 %v229, 32
    %v237 = vpop.permute.xlu0 %236
    %v239 = vmul.f32 %v228, %v237
    %241 = vrot.lane.b32.xlu0 %v239, 32
    %v242 = vpop.permute.xlu0 %241
    %v244 = vadd.f32 %v234, %v242
    %v245 = vtanh.pop %v244
    %247 = vrot.lane.b32.xlu0 %v245, 32
    %v248 = vpop.permute.xlu0 %247
    %v250 = vmul.f32 %v228, %v248
    %v252 = vperm.slane %v197, 0
    %255 = vrot.lane.b32.xlu0 %v250, 64
    %v256 = vpop.permute.xlu0 %255
    %v257 = vsel %vm200, %v256, 0
    %259 = vmatpush.msra.mxu0 0.0
    %260 = vmatpush.msra.mxu0 0.0
    %261 = vmatpush.msra.mxu0 0.0
    %262 = vmatpush.msra.mxu0 0.0
    %263 = vmatpush.msra.mxu0 0.0
    %264 = vmatpush.msra.mxu0 0.0
    %265 = vmatpush.msra.mxu0 0.0
    %266 = vmatpush.msra.mxu0 0.0
    %267 = vmatpush.msra.mxu0 0.0
    %268 = vmatpush.msra.mxu0 0.0
    %269 = vmatpush.msra.mxu0 0.0
    %270 = vmatpush.msra.mxu0 0.0
    %271 = vmatpush.msra.mxu0 %v196
    %272 = vmatpush.msra.mxu0 %v195
    %273 = vmatpush.msra.mxu0 %v194
    %274 = vmatpush.msra.mxu0 %v193
    %275 = vmatmul.f32.gmra.mxu0 %v257
    %v276 = vpop.f32.mrf.mxu0
    %v277 = vadd.f32 %v252, %v276
    %278 = vdwg.mxu0
    %279 = vmax.xlane.f32.xlu0 %v277
    %v280 = vpop.xlane.xlu0 %279
    %v281 = vsub.f32 %v277, %v280
    %v282 = vmul.f32 %v281, 1.442695
    %v283 = vpow.pop %v282
    %284 = vadd.xlane.f32.xlu0 %v283
    %v285 = vpop.xlane.xlu0 %284
    %v286 = vlog2.pop %v285
    %v287 = vmul.f32 %v286, 0.6931472
    %v288 = vsub.f32 %v281, %v287
    %289 = vmatpush.msra.mxu0 0.0
    %290 = vmatpush.msra.mxu0 0.0
    %291 = vmatpush.msra.mxu0 0.0
    %292 = vmatpush.msra.mxu0 0.0
    %293 = vmatpush.msra.mxu0 0.0
    %294 = vmatpush.msra.mxu0 0.0
    %295 = vmatpush.msra.mxu0 0.0
    %296 = vmatpush.msra.mxu0 0.0
    %297 = vmatpush.msra.mxu0 0.0
    %298 = vmatpush.msra.mxu0 0.0
    %299 = vmatpush.msra.mxu0 0.0
    %300 = vmatpush.msra.mxu0 0.0
    %301 = vmatpush.msra.mxu0 %v192
    %302 = vmatpush.msra.mxu0 %v191
    %303 = vmatpush.msra.mxu0 %v190
    %304 = vmatpush.msra.mxu0 %v189
    %305 = vmatmul.f32.gmra.mxu0 %v257
    %v306 = vpop.f32.mrf.mxu0
    %v307 = vadd.f32 0.0, %v306
    %308 = vdwg.mxu0
    %v309 = vadd.f32 %v169, %v307
    %v310 = vmul.f32 %v309, 0.5
    %v311 = vtanh.pop %v310
    %v312 = vmul.f32 %v311, 0.5
    %v313 = vadd.f32 %v312, 0.5
    %v314 = vtanh.pop %v309
    %v315 = vmul.f32 %v313, %v244
    %317 = vrot.lane.b32.xlu0 %v314, 32
    %v318 = vpop.permute.xlu0 %317
    %v320 = vmul.f32 %v313, %v318
    %322 = vrot.lane.b32.xlu0 %v320, 32
    %v323 = vpop.permute.xlu0 %322
    %v325 = vadd.f32 %v315, %v323
    %v326 = vtanh.pop %v325
    %328 = vrot.lane.b32.xlu0 %v326, 32
    %v329 = vpop.permute.xlu0 %328
    %v331 = vmul.f32 %v313, %v329
    %333 = vrot.lane.b32.xlu0 %v331, 64
    %v334 = vpop.permute.xlu0 %333
    %v335 = vsel %vm200, %v334, 0
    %337 = vmatpush.msra.mxu0 0.0
    %338 = vmatpush.msra.mxu0 0.0
    %339 = vmatpush.msra.mxu0 0.0
    %340 = vmatpush.msra.mxu0 0.0
    %341 = vmatpush.msra.mxu0 0.0
    %342 = vmatpush.msra.mxu0 0.0
    %343 = vmatpush.msra.mxu0 0.0
    %344 = vmatpush.msra.mxu0 0.0
    %345 = vmatpush.msra.mxu0 0.0
    %346 = vmatpush.msra.mxu0 0.0
    %347 = vmatpush.msra.mxu0 0.0
    %348 = vmatpush.msra.mxu0 0.0
    %349 = vmatpush.msra.mxu0 %v196
    %350 = vmatpush.msra.mxu0 %v195
    %351 = vmatpush.msra.mxu0 %v194
    %352 = vmatpush.msra.mxu0 %v193
    %353 = vmatmul.f32.gmra.mxu0 %v335
    %v354 = vpop.f32.mrf.mxu0
    %v355 = vadd.f32 %v252, %v354
    %356 = vdwg.mxu0
    %357 = vmax.xlane.f32.xlu0 %v355
    %v358 = vpop.xlane.xlu0 %357
    %v359 = vsub.f32 %v355, %v358
    %v360 = vmul.f32 %v359, 1.442695
    %v361 = vpow.pop %v360
    %362 = vadd.xlane.f32.xlu0 %v361
    %v363 = vpop.xlane.xlu0 %362
    %v364 = vlog2.pop %v363
    %v365 = vmul.f32 %v364, 0.6931472
    %v366 = vsub.f32 %v359, %v365
    %367 = vmatpush.msra.mxu0 0.0
    %368 = vmatpush.msra.mxu0 0.0
    %369 = vmatpush.msra.mxu0 0.0
    %370 = vmatpush.msra.mxu0 0.0
    %371 = vmatpush.msra.mxu0 0.0
    %372 = vmatpush.msra.mxu0 0.0
    %373 = vmatpush.msra.mxu0 0.0
    %374 = vmatpush.msra.mxu0 0.0
    %375 = vmatpush.msra.mxu0 0.0
    %376 = vmatpush.msra.mxu0 0.0
    %377 = vmatpush.msra.mxu0 0.0
    %378 = vmatpush.msra.mxu0 0.0
    %379 = vmatpush.msra.mxu0 %v192
    %380 = vmatpush.msra.mxu0 %v191
    %381 = vmatpush.msra.mxu0 %v190
    %382 = vmatpush.msra.mxu0 %v189
    %383 = vmatmul.f32.gmra.mxu0 %v335
    %v384 = vpop.f32.mrf.mxu0
    %v385 = vadd.f32 0.0, %v384
    %386 = vdwg.mxu0
    %v387 = vadd.f32 %v172, %v385
    %v388 = vmul.f32 %v387, 0.5
    %v389 = vtanh.pop %v388
    %v390 = vmul.f32 %v389, 0.5
    %v391 = vadd.f32 %v390, 0.5
    %v392 = vtanh.pop %v387
    %v393 = vmul.f32 %v391, %v325
    %395 = vrot.lane.b32.xlu0 %v392, 32
    %v396 = vpop.permute.xlu0 %395
    %v398 = vmul.f32 %v391, %v396
    %400 = vrot.lane.b32.xlu0 %v398, 32
    %v401 = vpop.permute.xlu0 %400
    %v403 = vadd.f32 %v393, %v401
    %v404 = vtanh.pop %v403
    %406 = vrot.lane.b32.xlu0 %v404, 32
    %v407 = vpop.permute.xlu0 %406
    %v409 = vmul.f32 %v391, %v407
    %411 = vrot.lane.b32.xlu0 %v409, 64
    %v412 = vpop.permute.xlu0 %411
    %v413 = vsel %vm200, %v412, 0
    %415 = vmatpush.msra.mxu0 0.0
    %416 = vmatpush.msra.mxu0 0.0
    %417 = vmatpush.msra.mxu0 0.0
    %418 = vmatpush.msra.mxu0 0.0
    %419 = vmatpush.msra.mxu0 0.0
    %420 = vmatpush.msra.mxu0 0.0
    %421 = vmatpush.msra.mxu0 0.0
    %422 = vmatpush.msra.mxu0 0.0
    %423 = vmatpush.msra.mxu0 0.0
    %424 = vmatpush.msra.mxu0 0.0
    %425 = vmatpush.msra.mxu0 0.0
    %426 = vmatpush.msra.mxu0 0.0
    %427 = vmatpush.msra.mxu0 %v196
    %428 = vmatpush.msra.mxu0 %v195
    %429 = vmatpush.msra.mxu0 %v194
    %430 = vmatpush.msra.mxu0 %v193
    %431 = vmatmul.f32.gmra.mxu0 %v413
    %v432 = vpop.f32.mrf.mxu0
    %v433 = vadd.f32 %v252, %v432
    %434 = vdwg.mxu0
    %435 = vmax.xlane.f32.xlu0 %v433
    %v436 = vpop.xlane.xlu0 %435
    %v437 = vsub.f32 %v433, %v436
    %v438 = vmul.f32 %v437, 1.442695
    %v439 = vpow.pop %v438
    %440 = vadd.xlane.f32.xlu0 %v439
    %v441 = vpop.xlane.xlu0 %440
    %v442 = vlog2.pop %v441
    %v443 = vmul.f32 %v442, 0.6931472
    %v444 = vsub.f32 %v437, %v443
    %445 = vmatpush.msra.mxu0 0.0
    %446 = vmatpush.msra.mxu0 0.0
    %447 = vmatpush.msra.mxu0 0.0
    %448 = vmatpush.msra.mxu0 0.0
    %449 = vmatpush.msra.mxu0 0.0
    %450 = vmatpush.msra.mxu0 0.0
    %451 = vmatpush.msra.mxu0 0.0
    %452 = vmatpush.msra.mxu0 0.0
    %453 = vmatpush.msra.mxu0 0.0
    %454 = vmatpush.msra.mxu0 0.0
    %455 = vmatpush.msra.mxu0 0.0
    %456 = vmatpush.msra.mxu0 0.0
    %457 = vmatpush.msra.mxu0 %v192
    %458 = vmatpush.msra.mxu0 %v191
    %459 = vmatpush.msra.mxu0 %v190
    %460 = vmatpush.msra.mxu0 %v189
    %461 = vmatmul.f32.gmra.mxu0 %v413
    %v462 = vpop.f32.mrf.mxu0
    %v463 = vadd.f32 0.0, %v462
    %464 = vdwg.mxu0
    %v465 = vadd.f32 %v175, %v463
    %v466 = vmul.f32 %v465, 0.5
    %v467 = vtanh.pop %v466
    %v468 = vmul.f32 %v467, 0.5
    %v469 = vadd.f32 %v468, 0.5
    %v470 = vtanh.pop %v465
    %v471 = vmul.f32 %v469, %v403
    %473 = vrot.lane.b32.xlu0 %v470, 32
    %v474 = vpop.permute.xlu0 %473
    %v476 = vmul.f32 %v469, %v474
    %478 = vrot.lane.b32.xlu0 %v476, 32
    %v479 = vpop.permute.xlu0 %478
    %v481 = vadd.f32 %v471, %v479
    %v482 = vtanh.pop %v481
    %484 = vrot.lane.b32.xlu0 %v482, 32
    %v485 = vpop.permute.xlu0 %484
    %v487 = vmul.f32 %v469, %v485
    %489 = vrot.lane.b32.xlu0 %v487, 64
    %v490 = vpop.permute.xlu0 %489
    %v491 = vsel %vm200, %v490, 0
    %493 = vmatpush.msra.mxu0 0.0
    %494 = vmatpush.msra.mxu0 0.0
    %495 = vmatpush.msra.mxu0 0.0
    %496 = vmatpush.msra.mxu0 0.0
    %497 = vmatpush.msra.mxu0 0.0
    %498 = vmatpush.msra.mxu0 0.0
    %499 = vmatpush.msra.mxu0 0.0
    %500 = vmatpush.msra.mxu0 0.0
    %501 = vmatpush.msra.mxu0 0.0
    %502 = vmatpush.msra.mxu0 0.0
    %503 = vmatpush.msra.mxu0 0.0
    %504 = vmatpush.msra.mxu0 0.0
    %505 = vmatpush.msra.mxu0 %v196
    %506 = vmatpush.msra.mxu0 %v195
    %507 = vmatpush.msra.mxu0 %v194
    %508 = vmatpush.msra.mxu0 %v193
    %509 = vmatmul.f32.gmra.mxu0 %v491
    %v510 = vpop.f32.mrf.mxu0
    %v511 = vadd.f32 %v252, %v510
    %512 = vdwg.mxu0
    %513 = vmax.xlane.f32.xlu0 %v511
    %v514 = vpop.xlane.xlu0 %513
    %v515 = vsub.f32 %v511, %v514
    %v516 = vmul.f32 %v515, 1.442695
    %v517 = vpow.pop %v516
    %518 = vadd.xlane.f32.xlu0 %v517
    %v519 = vpop.xlane.xlu0 %518
    %v520 = vlog2.pop %v519
    %v521 = vmul.f32 %v520, 0.6931472
    %v522 = vsub.f32 %v515, %v521
    %523 = vmatpush.msra.mxu0 0.0
    %524 = vmatpush.msra.mxu0 0.0
    %525 = vmatpush.msra.mxu0 0.0
    %526 = vmatpush.msra.mxu0 0.0
    %527 = vmatpush.msra.mxu0 0.0
    %528 = vmatpush.msra.mxu0 0.0
    %529 = vmatpush.msra.mxu0 0.0
    %530 = vmatpush.msra.mxu0 0.0
    %531 = vmatpush.msra.mxu0 0.0
    %532 = vmatpush.msra.mxu0 0.0
    %533 = vmatpush.msra.mxu0 0.0
    %534 = vmatpush.msra.mxu0 0.0
    %535 = vmatpush.msra.mxu0 %v192
    %536 = vmatpush.msra.mxu0 %v191
    %537 = vmatpush.msra.mxu0 %v190
    %538 = vmatpush.msra.mxu0 %v189
    %539 = vmatmul.f32.gmra.mxu0 %v491
    %v540 = vpop.f32.mrf.mxu0
    %v541 = vadd.f32 0.0, %v540
    %542 = vdwg.mxu0
    %v543 = vadd.f32 %v178, %v541
    %v544 = vmul.f32 %v543, 0.5
    %v545 = vtanh.pop %v544
    %v546 = vmul.f32 %v545, 0.5
    %v547 = vadd.f32 %v546, 0.5
    %v548 = vtanh.pop %v543
    %v549 = vmul.f32 %v547, %v481
    %551 = vrot.lane.b32.xlu0 %v548, 32
    %v552 = vpop.permute.xlu0 %551
    %v554 = vmul.f32 %v547, %v552
    %556 = vrot.lane.b32.xlu0 %v554, 32
    %v557 = vpop.permute.xlu0 %556
    %v559 = vadd.f32 %v549, %v557
    %v560 = vtanh.pop %v559
    %562 = vrot.lane.b32.xlu0 %v560, 32
    %v563 = vpop.permute.xlu0 %562
    %v565 = vmul.f32 %v547, %v563
    %567 = vrot.lane.b32.xlu0 %v565, 64
    %v568 = vpop.permute.xlu0 %567
    %v569 = vsel %vm200, %v568, 0
    %571 = vmatpush.msra.mxu0 0.0
    %572 = vmatpush.msra.mxu0 0.0
    %573 = vmatpush.msra.mxu0 0.0
    %574 = vmatpush.msra.mxu0 0.0
    %575 = vmatpush.msra.mxu0 0.0
    %576 = vmatpush.msra.mxu0 0.0
    %577 = vmatpush.msra.mxu0 0.0
    %578 = vmatpush.msra.mxu0 0.0
    %579 = vmatpush.msra.mxu0 0.0
    %580 = vmatpush.msra.mxu0 0.0
    %581 = vmatpush.msra.mxu0 0.0
    %582 = vmatpush.msra.mxu0 0.0
    %583 = vmatpush.msra.mxu0 %v196
    %584 = vmatpush.msra.mxu0 %v195
    %585 = vmatpush.msra.mxu0 %v194
    %586 = vmatpush.msra.mxu0 %v193
    %587 = vmatmul.f32.gmra.mxu0 %v569
    %v588 = vpop.f32.mrf.mxu0
    %v589 = vadd.f32 %v252, %v588
    %590 = vdwg.mxu0
    %591 = vmax.xlane.f32.xlu0 %v589
    %v592 = vpop.xlane.xlu0 %591
    %v593 = vsub.f32 %v589, %v592
    %v594 = vmul.f32 %v593, 1.442695
    %v595 = vpow.pop %v594
    %596 = vadd.xlane.f32.xlu0 %v595
    %v597 = vpop.xlane.xlu0 %596
    %v598 = vlog2.pop %v597
    %v599 = vmul.f32 %v598, 0.6931472
    %v600 = vsub.f32 %v593, %v599
    %601 = vmatpush.msra.mxu0 0.0
    %602 = vmatpush.msra.mxu0 0.0
    %603 = vmatpush.msra.mxu0 0.0
    %604 = vmatpush.msra.mxu0 0.0
    %605 = vmatpush.msra.mxu0 0.0
    %606 = vmatpush.msra.mxu0 0.0
    %607 = vmatpush.msra.mxu0 0.0
    %608 = vmatpush.msra.mxu0 0.0
    %609 = vmatpush.msra.mxu0 0.0
    %610 = vmatpush.msra.mxu0 0.0
    %611 = vmatpush.msra.mxu0 0.0
    %612 = vmatpush.msra.mxu0 0.0
    %613 = vmatpush.msra.mxu0 %v192
    %614 = vmatpush.msra.mxu0 %v191
    %615 = vmatpush.msra.mxu0 %v190
    %616 = vmatpush.msra.mxu0 %v189
    %617 = vmatmul.f32.gmra.mxu0 %v569
    %v618 = vpop.f32.mrf.mxu0
    %v619 = vadd.f32 0.0, %v618
    %620 = vdwg.mxu0
    %v621 = vadd.f32 %v181, %v619
    %v622 = vmul.f32 %v621, 0.5
    %v623 = vtanh.pop %v622
    %v624 = vmul.f32 %v623, 0.5
    %v625 = vadd.f32 %v624, 0.5
    %v626 = vtanh.pop %v621
    %v627 = vmul.f32 %v625, %v559
    %629 = vrot.lane.b32.xlu0 %v626, 32
    %v630 = vpop.permute.xlu0 %629
    %v632 = vmul.f32 %v625, %v630
    %634 = vrot.lane.b32.xlu0 %v632, 32
    %v635 = vpop.permute.xlu0 %634
    %v637 = vadd.f32 %v627, %v635
    %v638 = vtanh.pop %v637
    %640 = vrot.lane.b32.xlu0 %v638, 32
    %v641 = vpop.permute.xlu0 %640
    %v643 = vmul.f32 %v625, %v641
    %645 = vrot.lane.b32.xlu0 %v643, 64
    %v646 = vpop.permute.xlu0 %645
    %v647 = vsel %vm200, %v646, 0
    %649 = vmatpush.msra.mxu0 0.0
    %650 = vmatpush.msra.mxu0 0.0
    %651 = vmatpush.msra.mxu0 0.0
    %652 = vmatpush.msra.mxu0 0.0
    %653 = vmatpush.msra.mxu0 0.0
    %654 = vmatpush.msra.mxu0 0.0
    %655 = vmatpush.msra.mxu0 0.0
    %656 = vmatpush.msra.mxu0 0.0
    %657 = vmatpush.msra.mxu0 0.0
    %658 = vmatpush.msra.mxu0 0.0
    %659 = vmatpush.msra.mxu0 0.0
    %660 = vmatpush.msra.mxu0 0.0
    %661 = vmatpush.msra.mxu0 %v196
    %662 = vmatpush.msra.mxu0 %v195
    %663 = vmatpush.msra.mxu0 %v194
    %664 = vmatpush.msra.mxu0 %v193
    %665 = vmatmul.f32.gmra.mxu0 %v647
    %v666 = vpop.f32.mrf.mxu0
    %v667 = vadd.f32 %v252, %v666
    %668 = vdwg.mxu0
    %669 = vmax.xlane.f32.xlu0 %v667
    %v670 = vpop.xlane.xlu0 %669
    %v671 = vsub.f32 %v667, %v670
    %v672 = vmul.f32 %v671, 1.442695
    %v673 = vpow.pop %v672
    %674 = vadd.xlane.f32.xlu0 %v673
    %v675 = vpop.xlane.xlu0 %674
    %v676 = vlog2.pop %v675
    %v677 = vmul.f32 %v676, 0.6931472
    %v678 = vsub.f32 %v671, %v677
    %679 = vmatpush.msra.mxu0 0.0
    %680 = vmatpush.msra.mxu0 0.0
    %681 = vmatpush.msra.mxu0 0.0
    %682 = vmatpush.msra.mxu0 0.0
    %683 = vmatpush.msra.mxu0 0.0
    %684 = vmatpush.msra.mxu0 0.0
    %685 = vmatpush.msra.mxu0 0.0
    %686 = vmatpush.msra.mxu0 0.0
    %687 = vmatpush.msra.mxu0 0.0
    %688 = vmatpush.msra.mxu0 0.0
    %689 = vmatpush.msra.mxu0 0.0
    %690 = vmatpush.msra.mxu0 0.0
    %691 = vmatpush.msra.mxu0 %v192
    %692 = vmatpush.msra.mxu0 %v191
    %693 = vmatpush.msra.mxu0 %v190
    %694 = vmatpush.msra.mxu0 %v189
    %695 = vmatmul.f32.gmra.mxu0 %v647
    %v696 = vpop.f32.mrf.mxu0
    %v697 = vadd.f32 0.0, %v696
    %698 = vdwg.mxu0
    %v699 = vadd.f32 %v184, %v697
    %v700 = vmul.f32 %v699, 0.5
    %v701 = vtanh.pop %v700
    %v702 = vmul.f32 %v701, 0.5
    %v703 = vadd.f32 %v702, 0.5
    %v704 = vtanh.pop %v699
    %v705 = vmul.f32 %v703, %v637
    %707 = vrot.lane.b32.xlu0 %v704, 32
    %v708 = vpop.permute.xlu0 %707
    %v710 = vmul.f32 %v703, %v708
    %712 = vrot.lane.b32.xlu0 %v710, 32
    %v713 = vpop.permute.xlu0 %712
    %v715 = vadd.f32 %v705, %v713
    %v716 = vtanh.pop %v715
    %718 = vrot.lane.b32.xlu0 %v716, 32
    %v719 = vpop.permute.xlu0 %718
    %v721 = vmul.f32 %v703, %v719
    %723 = vrot.lane.b32.xlu0 %v721, 64
    %v724 = vpop.permute.xlu0 %723
    %v725 = vsel %vm200, %v724, 0
    %727 = vmatpush.msra.mxu0 0.0
    %728 = vmatpush.msra.mxu0 0.0
    %729 = vmatpush.msra.mxu0 0.0
    %730 = vmatpush.msra.mxu0 0.0
    %731 = vmatpush.msra.mxu0 0.0
    %732 = vmatpush.msra.mxu0 0.0
    %733 = vmatpush.msra.mxu0 0.0
    %734 = vmatpush.msra.mxu0 0.0
    %735 = vmatpush.msra.mxu0 0.0
    %736 = vmatpush.msra.mxu0 0.0
    %737 = vmatpush.msra.mxu0 0.0
    %738 = vmatpush.msra.mxu0 0.0
    %739 = vmatpush.msra.mxu0 %v196
    %740 = vmatpush.msra.mxu0 %v195
    %741 = vmatpush.msra.mxu0 %v194
    %742 = vmatpush.msra.mxu0 %v193
    %743 = vmatmul.f32.gmra.mxu0 %v725
    %v744 = vpop.f32.mrf.mxu0
    %v745 = vadd.f32 %v252, %v744
    %746 = vdwg.mxu0
    %747 = vmax.xlane.f32.xlu0 %v745
    %v748 = vpop.xlane.xlu0 %747
    %v749 = vsub.f32 %v745, %v748
    %v750 = vmul.f32 %v749, 1.442695
    %v751 = vpow.pop %v750
    %752 = vadd.xlane.f32.xlu0 %v751
    %v753 = vpop.xlane.xlu0 %752
    %v754 = vlog2.pop %v753
    %v755 = vmul.f32 %v754, 0.6931472
    %v756 = vsub.f32 %v749, %v755
    %757 = vmatpush.msra.mxu0 0.0
    %758 = vmatpush.msra.mxu0 0.0
    %759 = vmatpush.msra.mxu0 0.0
    %760 = vmatpush.msra.mxu0 0.0
    %761 = vmatpush.msra.mxu0 0.0
    %762 = vmatpush.msra.mxu0 0.0
    %763 = vmatpush.msra.mxu0 0.0
    %764 = vmatpush.msra.mxu0 0.0
    %765 = vmatpush.msra.mxu0 0.0
    %766 = vmatpush.msra.mxu0 0.0
    %767 = vmatpush.msra.mxu0 0.0
    %768 = vmatpush.msra.mxu0 0.0
    %769 = vmatpush.msra.mxu0 %v192
    %770 = vmatpush.msra.mxu0 %v191
    %771 = vmatpush.msra.mxu0 %v190
    %772 = vmatpush.msra.mxu0 %v189
    %773 = vmatmul.f32.gmra.mxu0 %v725
    %v774 = vpop.f32.mrf.mxu0
    %v775 = vadd.f32 0.0, %v774
    %776 = vdwg.mxu0
    %v777 = vadd.f32 %v187, %v775
    %v778 = vmul.f32 %v777, 0.5
    %v779 = vtanh.pop %v778
    %v780 = vmul.f32 %v779, 0.5
    %v781 = vadd.f32 %v780, 0.5
    %v782 = vtanh.pop %v777
    %v783 = vmul.f32 %v781, %v715
    %785 = vrot.lane.b32.xlu0 %v782, 32
    %v786 = vpop.permute.xlu0 %785
    %v788 = vmul.f32 %v781, %v786
    %790 = vrot.lane.b32.xlu0 %v788, 32
    %v791 = vpop.permute.xlu0 %790
    %v793 = vadd.f32 %v783, %v791
    %v794 = vtanh.pop %v793
    %796 = vrot.lane.b32.xlu0 %v794, 32
    %v797 = vpop.permute.xlu0 %796
    %v799 = vmul.f32 %v781, %v797
    %801 = vrot.lane.b32.xlu0 %v799, 64
    %v802 = vpop.permute.xlu0 %801
    %v803 = vsel %vm200, %v802, 0
    %805 = vmatpush.msra.mxu0 0.0
    %806 = vmatpush.msra.mxu0 0.0
    %807 = vmatpush.msra.mxu0 0.0
    %808 = vmatpush.msra.mxu0 0.0
    %809 = vmatpush.msra.mxu0 0.0
    %810 = vmatpush.msra.mxu0 0.0
    %811 = vmatpush.msra.mxu0 0.0
    %812 = vmatpush.msra.mxu0 0.0
    %813 = vmatpush.msra.mxu0 0.0
    %814 = vmatpush.msra.mxu0 0.0
    %815 = vmatpush.msra.mxu0 0.0
    %816 = vmatpush.msra.mxu0 0.0
    %817 = vmatpush.msra.mxu0 %v196
    %818 = vmatpush.msra.mxu0 %v195
    %819 = vmatpush.msra.mxu0 %v194
    %820 = vmatpush.msra.mxu0 %v193
    %821 = vmatmul.f32.gmra.mxu0 %v803
    %v822 = vpop.f32.mrf.mxu0
    %v823 = vadd.f32 %v252, %v822
    %824 = vdwg.mxu0
    %825 = vmax.xlane.f32.xlu0 %v823
    %v826 = vpop.xlane.xlu0 %825
    %v827 = vsub.f32 %v823, %v826
    %v828 = vmul.f32 %v827, 1.442695
    %v829 = vpow.pop %v828
    %830 = vadd.xlane.f32.xlu0 %v829
    %v831 = vpop.xlane.xlu0 %830
    %v832 = vlog2.pop %v831
    %v833 = vmul.f32 %v832, 0.6931472
    %v834 = vsub.f32 %v827, %v833
    %835 = vst [vmem:[#allocation8] sm:$0xff] %v288
    %836 = vst [vmem:[#allocation8 + $0x8] sm:$0xff] %v366
    %837 = vst [vmem:[#allocation8 + $0x10] sm:$0xff] %v444
    %838 = vst [vmem:[#allocation8 + $0x18] sm:$0xff] %v522
    %839 = vst [vmem:[#allocation8 + $0x20] sm:$0xff] %v600
    %840 = vst [vmem:[#allocation8 + $0x28] sm:$0xff] %v678
    %841 = vst [vmem:[#allocation8 + $0x30] sm:$0xff] %v756
    %842 = vst [vmem:[#allocation8 + $0x38] sm:$0xff] %v834
    %844 = vst.msk [vmem:[#allocation9] sm:$0xff] %vm200, %v802
    %846 = vrot.lane.b32.xlu0 %v793, 96
    %v847 = vpop.permute.xlu0 %846
    %849 = vst.msk [vmem:[#allocation11] sm:$0xff] %vm200, %v847
    // Predicated region
    $region42: #{tpu_custom_call.1} parent=1 // pred_check
      _
    $region43: #{tpu_custom_call.1} parent=1 // pred_check_branch
      %851 = sbr.rel (0) target = $region45
    $region44: #{tpu_custom_call.1} parent=1 // pred_region
      %853 = vsyncadd [#allocation4], 0
      %s855 = sshll.u32 [#allocation8], 4
      %s856 = int_to_ptr.vmem [resolvable:$true] %s855
      %s857 = sshll.u32 %s7, 4
      %s858 = int_to_ptr.hbm [resolvable:$true] %s857
      %860 = dma.vmem_to_hbm [thread:$0]  %s856, 1024, %s858, [#allocation4]
    $region45: #{tpu_custom_call.1} parent=1 // pred_fallthru
      _
    // Predicated region
    $region46: #{tpu_custom_call.1} parent=1 // pred_check
      _
    $region47: #{tpu_custom_call.1} parent=1 // pred_check_branch
      %862 = sbr.rel (0) target = $region49
    $region48: #{tpu_custom_call.1} parent=1 // pred_region
      %864 = vsyncadd [#allocation10], 0
      %s866 = sshll.u32 [#allocation9], 4
      %s867 = int_to_ptr.vmem [resolvable:$true] %s866
      %s868 = sshll.u32 %s8, 4
      %s869 = int_to_ptr.hbm [resolvable:$true] %s868
      %871 = dma.vmem_to_hbm [thread:$0]  %s867, 128, %s869, [#allocation10]
    $region49: #{tpu_custom_call.1} parent=1 // pred_fallthru
      _
    // Predicated region
    $region50: #{tpu_custom_call.1} parent=1 // pred_check
      _
    $region51: #{tpu_custom_call.1} parent=1 // pred_check_branch
      %873 = sbr.rel (0) target = $region53
    $region52: #{tpu_custom_call.1} parent=1 // pred_region
      %875 = vsyncadd [#allocation10], 0
      %s877 = sshll.u32 [#allocation11], 4
      %s878 = int_to_ptr.vmem [resolvable:$true] %s877
      %s879 = sshll.u32 %s9, 4
      %s880 = int_to_ptr.hbm [resolvable:$true] %s879
      %882 = dma.vmem_to_hbm [thread:$0]  %s878, 128, %s880, [#allocation10]
    $region53: #{tpu_custom_call.1} parent=1 // pred_fallthru
      _
    // Predicated region
    $region54: #{tpu_custom_call.1} parent=1 // pred_check
      _
    $region55: #{tpu_custom_call.1} parent=1 // pred_check_branch
      %884 = sbr.rel (0) target = $region57
    $region56: #{tpu_custom_call.1} parent=1 // pred_region
      %886 = dma.done [#allocation4], 1024
    $region57: #{tpu_custom_call.1} parent=1 // pred_fallthru
      _
    // Predicated region
    $region58: #{tpu_custom_call.1} parent=1 // pred_check
      _
    $region59: #{tpu_custom_call.1} parent=1 // pred_check_branch
      %888 = sbr.rel (0) target = $region61
    $region60: #{tpu_custom_call.1} parent=1 // pred_region
      %890 = dma.done [#allocation10], 128
    $region61: #{tpu_custom_call.1} parent=1 // pred_fallthru
      _
    // Predicated region
    $region62: #{tpu_custom_call.1} parent=1 // pred_check
      _
    $region63: #{tpu_custom_call.1} parent=1 // pred_check_branch
      %892 = sbr.rel (0) target = $region65
    $region64: #{tpu_custom_call.1} parent=1 // pred_region
      %894 = dma.done [#allocation10], 128
    $region65: #{tpu_custom_call.1} parent=1 // pred_fallthru
      _
    %895 = vsyncpa [#allocation3], 1
    %896 = vsyncpa [#allocation6], 1
    %897 = vsyncpa [#allocation4], 1
    %898 = vsyncpa [#allocation10], 1

</llo_original>
